<compile_context>
chip_gen: v5e
topology: v5e:2x2
jax: 0.10.0
libtpu: 0.0.40
codegen_flags: <defaults>
</compile_context>

<pallas_src>
import functools

import jax
import jax.numpy as jnp
from jax import lax
from jax.experimental import pallas as pl
from jax.experimental.pallas import tpu as pltpu

LANE = 128
SUBLANE = 8


# ---------------------------------------------------------------------------
# Packed-parameter layout (shared by wrapper and kernel)
# ---------------------------------------------------------------------------
def _param_layout(n_layers, T, H, O, D):
    """Column/row layout of the single packed f32 parameter buffer.

    Columns (each block starts at a multiple of 128 lanes):
      layer l < L-1 : [wh_l (3H) | pad][wi_{l+1} (3H) | pad]           width 256
      layer L-1     : T blocks of [wh_{L-1} (3H) | wfc[t] (O) | pad]   width T*128
      tail          : wi_0 (rows 0..D-1), per-layer biases, bfc        width 128
    """
    G = 3 * H
    # TODO(synk): if 3H or 3H+O exceeds 128, tile gate blocks across lane tiles.
    assert G <= LANE and G + O <= LANE, "gate block must fit one 128-lane tile"
    layer_off = []
    col = 0
    for l in range(n_layers):
        layer_off.append(col)
        col += 2 * LANE if l < n_layers - 1 else T * LANE
    small_off = col
    col += LANE
    rows = max(H, D + 2 * n_layers + 1)
    rows = ((rows + SUBLANE - 1) // SUBLANE) * SUBLANE
    return layer_off, small_off, col, rows


# ---------------------------------------------------------------------------
# Pallas kernel
# ---------------------------------------------------------------------------
def make_gru_kernel(n_layers, T, H, O, Bp, D):
    G = 3 * H
    L = n_layers
    layer_off, small_off, _, _ = _param_layout(L, T, H, O, D)

    def gru_gates(gi, gh, h_prev, bhn):
        r = jax.nn.sigmoid(gi[:, 0:H] + gh[:, 0:H])
        z = jax.nn.sigmoid(gi[:, H:2 * H] + gh[:, H:2 * H])
        n = jnp.tanh(gi[:, 2 * H:3 * H] + r * (gh[:, 2 * H:3 * H] + bhn))
        return (1.0 - z) * n + z * h_prev

    def kernel(x_ref, p_ref, out_ref):
        # ---- hoisted parameter reads (once per kernel) --------------------
        bic, bhn = [], []
        for l in range(L):
            brow = D + 2 * l
            bic.append(p_ref[brow:brow + 1, small_off:small_off + G])     # (1,3H)
            bhn.append(jnp.broadcast_to(
                p_ref[brow + 1:brow + 2, small_off:small_off + H], (Bp, H)))
        wi0 = p_ref[0:D, small_off:small_off + G]                         # (D,3H)
        bfc = p_ref[D + 2 * L:D + 2 * L + 1, small_off:small_off + O]     # (1,O)
        # fused [wh_l | pad | wi_{l+1}] weights of the intermediate layers
        whf = [p_ref[0:H, layer_off[l]:layer_off[l] + LANE + G]
               for l in range(L - 1)]

        # ---- whole-sequence input projection of layer 0 (one dense dot) ---
        gi0 = (jnp.dot(x_ref[...], wi0, preferred_element_type=jnp.float32)
               + bic[0])                                                   # (T*Bp,3H)

        # ---- wavefront over diagonals d = t + l ----------------------------
        h = [jnp.zeros((Bp, H), jnp.float32) for _ in range(L)]
        gi_in = [None] * L               # gi of layer l at its current step
        acc = jnp.broadcast_to(bfc, (Bp, O))
        zero_gh = jnp.zeros((Bp, G), jnp.float32)

        for d in range(T + L - 1):
            # 1) issue the fused recurrence matmuls (all LHS come from diag d-1,
            #    so the matmuls of different layers are independent)
            mm = [None] * L
            for l in range(L):
                t = d - l
                if 1 <= t <= T:
                    if l < L - 1:
                        w = whf[l]                                  # (H, 128+3H)
                    else:
                        base = layer_off[l] + (t - 1) * LANE
                        w = p_ref[0:H, base:base + G + O]           # (H, 3H+O)
                    mm[l] = jnp.dot(h[l], w,
                                    preferred_element_type=jnp.float32)
            # 2) route matmul by-products: next layer's gi / FC accumulation
            for l in range(L):
                t = d - l
                if 1 <= t <= T:
                    if l < L - 1:
                        gi_in[l + 1] = mm[l][:, LANE:LANE + G] + bic[l + 1]
                    else:
                        acc = acc + mm[l][:, G:G + O]
            # 3) gate nonlinearities for every active (layer, step)
            for l in range(L):
                t = d - l
                if 0 <= t <= T - 1:
                    gi = gi0[t * Bp:(t + 1) * Bp, :] if l == 0 else gi_in[l]
                    gh = mm[l][:, 0:G] if t >= 1 else zero_gh
                    h[l] = gru_gates(gi, gh, h[l], bhn[l])

        # ---- epilogue: FC contribution of the last hidden state ------------
        base = layer_off[L - 1] + (T - 1) * LANE
        wfc_last = p_ref[0:H, base + G:base + G + O]
        out_ref[...] = acc + jnp.dot(h[L - 1], wfc_last,
                                     preferred_element_type=jnp.float32)

    return kernel


# ---------------------------------------------------------------------------
# Wrapper (parameter packing + pallas_call)
# ---------------------------------------------------------------------------
def gru_net_forward(x, gru_params, w_fc, b_fc, *, hidden_size, n_layers,
                    output_size, seq_length):
    """x: (B, T, D) float32.  Returns (B, output_size) float32."""
    B, T, D = x.shape
    H, O, L = hidden_size, output_size, n_layers
    G = 3 * H
    assert T == seq_length and len(gru_params) == L

    Bp = ((B + SUBLANE - 1) // SUBLANE) * SUBLANE      # pad batch to sublane tile
    layer_off, small_off, n_cols, n_rows = _param_layout(L, T, H, O, D)

    # time-major, zero-padded batch, flattened: row index = t*Bp + b
    x_tm = jnp.transpose(x, (1, 0, 2)).astype(jnp.float32)       # (T,B,D)
    x_tm = jnp.pad(x_tm, ((0, 0), (0, Bp - B), (0, 0)))
    x_flat = x_tm.reshape(T * Bp, D)

    # -------- pack every parameter into ONE contiguous f32 buffer ----------
    P = jnp.zeros((n_rows, n_cols), jnp.float32)
    # fc weight (O, T*H) -> (T, H, O) so wfc_r[t,h,o] = w_fc[o, t*H + h]
    wfc_r = jnp.transpose(w_fc.reshape(O, T, H), (1, 2, 0)).astype(jnp.float32)
    for l, (w_ih, w_hh, b_ih, b_hh) in enumerate(gru_params):
        wh = jnp.transpose(w_hh).astype(jnp.float32)             # (H,3H)
        off = layer_off[l]
        if l < L - 1:
            wi_next = jnp.transpose(gru_params[l + 1][0]).astype(jnp.float32)
            P = P.at[0:H, off:off + G].set(wh)
            P = P.at[0:H, off + LANE:off + LANE + G].set(wi_next)
        else:
            for t in range(T):
                base = off + t * LANE
                P = P.at[0:H, base:base + G].set(wh)
                P = P.at[0:H, base + G:base + G + O].set(wfc_r[t])
        # biases: (b_ir+b_hr, b_iz+b_hz, b_in) folded into gi; b_hn kept
        # separate (it must sit inside the r* term).
        bic = jnp.concatenate([b_ih[0:H] + b_hh[0:H],
                               b_ih[H:2 * H] + b_hh[H:2 * H],
                               b_ih[2 * H:3 * H]]).astype(jnp.float32)
        brow = D + 2 * l
        P = P.at[brow, small_off:small_off + G].set(bic)
        P = P.at[brow + 1, small_off:small_off + H].set(
            b_hh[2 * H:3 * H].astype(jnp.float32))
    P = P.at[0:D, small_off:small_off + G].set(
        jnp.transpose(gru_params[0][0]).astype(jnp.float32))
    P = P.at[D + 2 * L, small_off:small_off + O].set(b_fc.astype(jnp.float32))

    kernel = make_gru_kernel(L, T, H, O, Bp, D)

    # Single invocation: no grid, whole (tiny) operands resident in VMEM.
    out = pl.pallas_call(
        kernel,
        out_shape=jax.ShapeDtypeStruct((Bp, O), jnp.float32),
        in_specs=[pl.BlockSpec(memory_space=pltpu.MemorySpace.VMEM)] * 2,
        out_specs=pl.BlockSpec(memory_space=pltpu.MemorySpace.VMEM),
    )(x_flat, P)
    return out[:B]


# ---------------------------------------------------------------------------
# Pure-JAX reference (mirrors torch.nn.GRU + Linear semantics)
# ---------------------------------------------------------------------------
def gru_net_reference(x, gru_params, w_fc, b_fc, hidden_size):
    B = x.shape[0]
    H = hidden_size
    layer_in = x  # (B, T, D)
    for (w_ih, w_hh, b_ih, b_hh) in gru_params:
        def step(h, x_t):
            gi = x_t @ w_ih.T + b_ih
            gh = h @ w_hh.T + b_hh
            i_r, i_z, i_n = jnp.split(gi, 3, axis=-1)
            h_r, h_z, h_n = jnp.split(gh, 3, axis=-1)
            r = jax.nn.sigmoid(i_r + h_r)
            z = jax.nn.sigmoid(i_z + h_z)
            n = jnp.tanh(i_n + r * h_n)
            h_new = (1.0 - z) * n + z * h
            return h_new, h_new

        h0 = jnp.zeros((B, H), jnp.float32)
        _, outs = lax.scan(step, h0, jnp.swapaxes(layer_in, 0, 1))
        layer_in = jnp.swapaxes(outs, 0, 1)
    flat = layer_in.reshape(B, -1)
    return flat @ w_fc.T + b_fc


# ---------------------------------------------------------------------------
# Main
# ---------------------------------------------------------------------------
if __name__ == "__main__":
    input_size = 8
    hidden_size = 32
    n_layers = 2
    output_size = 16
    seq_length = 8
    batch = 2

    key = jax.random.PRNGKey(0)

    def uinit(k, shape, bound):
        return jax.random.uniform(k, shape, jnp.float32, -bound, bound)

    bound = 1.0 / jnp.sqrt(hidden_size)

    keys = jax.random.split(key, 4 * n_layers + 3)
    gru_params = []
    kidx = 0
    for l in range(n_layers):
        d_in = input_size if l == 0 else hidden_size
        w_ih = uinit(keys[kidx + 0], (3 * hidden_size, d_in), bound)
        w_hh = uinit(keys[kidx + 1], (3 * hidden_size, hidden_size), bound)
        b_ih = uinit(keys[kidx + 2], (3 * hidden_size,), bound)
        b_hh = uinit(keys[kidx + 3], (3 * hidden_size,), bound)
        gru_params.append((w_ih, w_hh, b_ih, b_hh))
        kidx += 4

    fc_bound = 1.0 / jnp.sqrt(hidden_size * seq_length)
    w_fc = uinit(keys[kidx + 0], (output_size, hidden_size * seq_length), fc_bound)
    b_fc = uinit(keys[kidx + 1], (output_size,), fc_bound)

    x = jax.random.normal(keys[kidx + 2], (batch, seq_length, input_size),
                          jnp.float32)

    fwd = functools.partial(gru_net_forward,
                            hidden_size=hidden_size, n_layers=n_layers,
                            output_size=output_size, seq_length=seq_length)

    out = fwd(x, gru_params, w_fc, b_fc)
    out = jax.block_until_ready(out)

    ref = gru_net_reference(x, gru_params, w_fc, b_fc, hidden_size)
    ref = jax.block_until_ready(ref)

    assert out.shape == (batch, output_size)
    if not jnp.allclose(out, ref, atol=1e-4, rtol=1e-4):
        raise AssertionError(
            f"Pallas kernel mismatch vs reference; max err = "
            f"{jnp.max(jnp.abs(out - ref))}")

    print("KERNEL_OK")
</pallas_src>

<mosaic_0001>
module attributes {stable_mosaic.version = 11 : i64} {
  func.func @kernel(%arg0: memref<64x8xf32, #tpu.memory_space<vmem>>, %arg1: memref<32x1408xf32, #tpu.memory_space<vmem>>, %arg2: memref<8x16xf32, #tpu.memory_space<vmem>>) attributes {dimension_semantics = [], scalar_prefetch = 0 : i64, scratch_operands = 0 : i64, tpu.core_type = #tpu.core_type<tc>} {
    %c8 = arith.constant 8 : index
    %c1280 = arith.constant 1280 : index
    %0 = vector.load %arg1[%c8, %c1280] : memref<32x1408xf32, #tpu.memory_space<vmem>>, vector<1x96xf32>
    %c9 = arith.constant 9 : index
    %c1280_0 = arith.constant 1280 : index
    %1 = vector.load %arg1[%c9, %c1280_0] : memref<32x1408xf32, #tpu.memory_space<vmem>>, vector<1x32xf32>
    %2 = vector.shape_cast %1 : vector<1x32xf32> to vector<1x32xf32>
    %3 = vector.broadcast %2 : vector<1x32xf32> to vector<8x32xf32>
    %c10 = arith.constant 10 : index
    %c1280_1 = arith.constant 1280 : index
    %4 = vector.load %arg1[%c10, %c1280_1] : memref<32x1408xf32, #tpu.memory_space<vmem>>, vector<1x96xf32>
    %c11 = arith.constant 11 : index
    %c1280_2 = arith.constant 1280 : index
    %5 = vector.load %arg1[%c11, %c1280_2] : memref<32x1408xf32, #tpu.memory_space<vmem>>, vector<1x32xf32>
    %6 = vector.shape_cast %5 : vector<1x32xf32> to vector<1x32xf32>
    %7 = vector.broadcast %6 : vector<1x32xf32> to vector<8x32xf32>
    %c0 = arith.constant 0 : index
    %c1280_3 = arith.constant 1280 : index
    %8 = vector.load %arg1[%c0, %c1280_3] : memref<32x1408xf32, #tpu.memory_space<vmem>>, vector<8x96xf32>
    %c12 = arith.constant 12 : index
    %c1280_4 = arith.constant 1280 : index
    %9 = vector.load %arg1[%c12, %c1280_4] : memref<32x1408xf32, #tpu.memory_space<vmem>>, vector<1x16xf32>
    %c0_5 = arith.constant 0 : index
    %c0_6 = arith.constant 0 : index
    %10 = vector.load %arg1[%c0_5, %c0_6] : memref<32x1408xf32, #tpu.memory_space<vmem>>, vector<32x224xf32>
    %c0_7 = arith.constant 0 : index
    %c0_8 = arith.constant 0 : index
    %11 = vector.load %arg0[%c0_7, %c0_8] : memref<64x8xf32, #tpu.memory_space<vmem>>, vector<64x8xf32>
    %cst = arith.constant dense<0.000000e+00> : vector<64x96xf32>
    %12 = tpu.matmul %11, %8, %cst {dimension_numbers = #tpu.dot_dimension_numbers<[1], [0], [0], [1], [0, 0, 1, 1], [], []>} : vector<64x8xf32>, vector<8x96xf32>, vector<64x96xf32> -> vector<64x96xf32>
    %13 = vector.broadcast %0 : vector<1x96xf32> to vector<64x96xf32>
    %14 = arith.addf %12, %13 : vector<64x96xf32>
    %cst_9 = arith.constant 0.000000e+00 : f32
    %15 = vector.broadcast %cst_9 : f32 to vector<8x32xf32>
    %cst_10 = arith.constant 0.000000e+00 : f32
    %16 = vector.broadcast %cst_10 : f32 to vector<8x32xf32>
    %17 = vector.shape_cast %9 : vector<1x16xf32> to vector<1x16xf32>
    %18 = vector.broadcast %17 : vector<1x16xf32> to vector<8x16xf32>
    %cst_11 = arith.constant 0.000000e+00 : f32
    %19 = vector.broadcast %cst_11 : f32 to vector<8x96xf32>
    %20 = vector.extract_strided_slice %14 {offsets = [0, 0], sizes = [8, 96], strides = [1, 1]} : vector<64x96xf32> to vector<8x96xf32>
    %21 = vector.extract_strided_slice %20 {offsets = [0, 0], sizes = [8, 32], strides = [1, 1]} : vector<8x96xf32> to vector<8x32xf32>
    %22 = vector.extract_strided_slice %19 {offsets = [0, 0], sizes = [8, 32], strides = [1, 1]} : vector<8x96xf32> to vector<8x32xf32>
    %23 = arith.addf %21, %22 : vector<8x32xf32>
    %24 = arith.negf %23 : vector<8x32xf32>
    %25 = math.exp %24 : vector<8x32xf32>
    %cst_12 = arith.constant 1.000000e+00 : f32
    %26 = vector.broadcast %cst_12 : f32 to vector<8x32xf32>
    %27 = arith.addf %26, %25 : vector<8x32xf32>
    %28 = arith.divf %26, %27 : vector<8x32xf32>
    %29 = vector.extract_strided_slice %20 {offsets = [0, 32], sizes = [8, 32], strides = [1, 1]} : vector<8x96xf32> to vector<8x32xf32>
    %30 = vector.extract_strided_slice %19 {offsets = [0, 32], sizes = [8, 32], strides = [1, 1]} : vector<8x96xf32> to vector<8x32xf32>
    %31 = arith.addf %29, %30 : vector<8x32xf32>
    %32 = arith.negf %31 : vector<8x32xf32>
    %33 = math.exp %32 : vector<8x32xf32>
    %cst_13 = arith.constant 1.000000e+00 : f32
    %34 = vector.broadcast %cst_13 : f32 to vector<8x32xf32>
    %35 = arith.addf %34, %33 : vector<8x32xf32>
    %36 = arith.divf %34, %35 : vector<8x32xf32>
    %37 = vector.extract_strided_slice %20 {offsets = [0, 64], sizes = [8, 32], strides = [1, 1]} : vector<8x96xf32> to vector<8x32xf32>
    %38 = vector.extract_strided_slice %19 {offsets = [0, 64], sizes = [8, 32], strides = [1, 1]} : vector<8x96xf32> to vector<8x32xf32>
    %39 = arith.addf %38, %3 : vector<8x32xf32>
    %40 = arith.mulf %28, %39 : vector<8x32xf32>
    %41 = arith.addf %37, %40 : vector<8x32xf32>
    %42 = math.tanh %41 : vector<8x32xf32>
    %cst_14 = arith.constant 1.000000e+00 : f32
    %43 = vector.broadcast %cst_14 : f32 to vector<8x32xf32>
    %44 = arith.subf %43, %36 : vector<8x32xf32>
    %45 = arith.mulf %44, %42 : vector<8x32xf32>
    %46 = arith.mulf %36, %15 : vector<8x32xf32>
    %47 = arith.addf %45, %46 : vector<8x32xf32>
    %cst_15 = arith.constant dense<0.000000e+00> : vector<8x224xf32>
    %48 = tpu.matmul %47, %10, %cst_15 {dimension_numbers = #tpu.dot_dimension_numbers<[1], [0], [0], [1], [0, 0, 1, 1], [], []>} : vector<8x32xf32>, vector<32x224xf32>, vector<8x224xf32> -> vector<8x224xf32>
    %49 = vector.extract_strided_slice %48 {offsets = [0, 128], sizes = [8, 96], strides = [1, 1]} : vector<8x224xf32> to vector<8x96xf32>
    %50 = vector.broadcast %4 : vector<1x96xf32> to vector<8x96xf32>
    %51 = arith.addf %49, %50 : vector<8x96xf32>
    %52 = vector.extract_strided_slice %14 {offsets = [8, 0], sizes = [8, 96], strides = [1, 1]} : vector<64x96xf32> to vector<8x96xf32>
    %53 = vector.extract_strided_slice %48 {offsets = [0, 0], sizes = [8, 96], strides = [1, 1]} : vector<8x224xf32> to vector<8x96xf32>
    %54 = vector.extract_strided_slice %52 {offsets = [0, 0], sizes = [8, 32], strides = [1, 1]} : vector<8x96xf32> to vector<8x32xf32>
    %55 = vector.extract_strided_slice %53 {offsets = [0, 0], sizes = [8, 32], strides = [1, 1]} : vector<8x96xf32> to vector<8x32xf32>
    %56 = arith.addf %54, %55 : vector<8x32xf32>
    %57 = arith.negf %56 : vector<8x32xf32>
    %58 = math.exp %57 : vector<8x32xf32>
    %cst_16 = arith.constant 1.000000e+00 : f32
    %59 = vector.broadcast %cst_16 : f32 to vector<8x32xf32>
    %60 = arith.addf %59, %58 : vector<8x32xf32>
    %61 = arith.divf %59, %60 : vector<8x32xf32>
    %62 = vector.extract_strided_slice %52 {offsets = [0, 32], sizes = [8, 32], strides = [1, 1]} : vector<8x96xf32> to vector<8x32xf32>
    %63 = vector.extract_strided_slice %53 {offsets = [0, 32], sizes = [8, 32], strides = [1, 1]} : vector<8x96xf32> to vector<8x32xf32>
    %64 = arith.addf %62, %63 : vector<8x32xf32>
    %65 = arith.negf %64 : vector<8x32xf32>
    %66 = math.exp %65 : vector<8x32xf32>
    %cst_17 = arith.constant 1.000000e+00 : f32
    %67 = vector.broadcast %cst_17 : f32 to vector<8x32xf32>
    %68 = arith.addf %67, %66 : vector<8x32xf32>
    %69 = arith.divf %67, %68 : vector<8x32xf32>
    %70 = vector.extract_strided_slice %52 {offsets = [0, 64], sizes = [8, 32], strides = [1, 1]} : vector<8x96xf32> to vector<8x32xf32>
    %71 = vector.extract_strided_slice %53 {offsets = [0, 64], sizes = [8, 32], strides = [1, 1]} : vector<8x96xf32> to vector<8x32xf32>
    %72 = arith.addf %71, %3 : vector<8x32xf32>
    %73 = arith.mulf %61, %72 : vector<8x32xf32>
    %74 = arith.addf %70, %73 : vector<8x32xf32>
    %75 = math.tanh %74 : vector<8x32xf32>
    %cst_18 = arith.constant 1.000000e+00 : f32
    %76 = vector.broadcast %cst_18 : f32 to vector<8x32xf32>
    %77 = arith.subf %76, %69 : vector<8x32xf32>
    %78 = arith.mulf %77, %75 : vector<8x32xf32>
    %79 = arith.mulf %69, %47 : vector<8x32xf32>
    %80 = arith.addf %78, %79 : vector<8x32xf32>
    %81 = vector.extract_strided_slice %51 {offsets = [0, 0], sizes = [8, 32], strides = [1, 1]} : vector<8x96xf32> to vector<8x32xf32>
    %82 = vector.extract_strided_slice %19 {offsets = [0, 0], sizes = [8, 32], strides = [1, 1]} : vector<8x96xf32> to vector<8x32xf32>
    %83 = arith.addf %81, %82 : vector<8x32xf32>
    %84 = arith.negf %83 : vector<8x32xf32>
    %85 = math.exp %84 : vector<8x32xf32>
    %cst_19 = arith.constant 1.000000e+00 : f32
    %86 = vector.broadcast %cst_19 : f32 to vector<8x32xf32>
    %87 = arith.addf %86, %85 : vector<8x32xf32>
    %88 = arith.divf %86, %87 : vector<8x32xf32>
    %89 = vector.extract_strided_slice %51 {offsets = [0, 32], sizes = [8, 32], strides = [1, 1]} : vector<8x96xf32> to vector<8x32xf32>
    %90 = vector.extract_strided_slice %19 {offsets = [0, 32], sizes = [8, 32], strides = [1, 1]} : vector<8x96xf32> to vector<8x32xf32>
    %91 = arith.addf %89, %90 : vector<8x32xf32>
    %92 = arith.negf %91 : vector<8x32xf32>
    %93 = math.exp %92 : vector<8x32xf32>
    %cst_20 = arith.constant 1.000000e+00 : f32
    %94 = vector.broadcast %cst_20 : f32 to vector<8x32xf32>
    %95 = arith.addf %94, %93 : vector<8x32xf32>
    %96 = arith.divf %94, %95 : vector<8x32xf32>
    %97 = vector.extract_strided_slice %51 {offsets = [0, 64], sizes = [8, 32], strides = [1, 1]} : vector<8x96xf32> to vector<8x32xf32>
    %98 = vector.extract_strided_slice %19 {offsets = [0, 64], sizes = [8, 32], strides = [1, 1]} : vector<8x96xf32> to vector<8x32xf32>
    %99 = arith.addf %98, %7 : vector<8x32xf32>
    %100 = arith.mulf %88, %99 : vector<8x32xf32>
    %101 = arith.addf %97, %100 : vector<8x32xf32>
    %102 = math.tanh %101 : vector<8x32xf32>
    %cst_21 = arith.constant 1.000000e+00 : f32
    %103 = vector.broadcast %cst_21 : f32 to vector<8x32xf32>
    %104 = arith.subf %103, %96 : vector<8x32xf32>
    %105 = arith.mulf %104, %102 : vector<8x32xf32>
    %106 = arith.mulf %96, %16 : vector<8x32xf32>
    %107 = arith.addf %105, %106 : vector<8x32xf32>
    %cst_22 = arith.constant dense<0.000000e+00> : vector<8x224xf32>
    %108 = tpu.matmul %80, %10, %cst_22 {dimension_numbers = #tpu.dot_dimension_numbers<[1], [0], [0], [1], [0, 0, 1, 1], [], []>} : vector<8x32xf32>, vector<32x224xf32>, vector<8x224xf32> -> vector<8x224xf32>
    %c0_23 = arith.constant 0 : index
    %c256 = arith.constant 256 : index
    %109 = vector.load %arg1[%c0_23, %c256] : memref<32x1408xf32, #tpu.memory_space<vmem>>, vector<32x112xf32>
    %cst_24 = arith.constant dense<0.000000e+00> : vector<8x112xf32>
    %110 = tpu.matmul %107, %109, %cst_24 {dimension_numbers = #tpu.dot_dimension_numbers<[1], [0], [0], [1], [0, 0, 1, 1], [], []>} : vector<8x32xf32>, vector<32x112xf32>, vector<8x112xf32> -> vector<8x112xf32>
    %111 = vector.extract_strided_slice %108 {offsets = [0, 128], sizes = [8, 96], strides = [1, 1]} : vector<8x224xf32> to vector<8x96xf32>
    %112 = vector.broadcast %4 : vector<1x96xf32> to vector<8x96xf32>
    %113 = arith.addf %111, %112 : vector<8x96xf32>
    %114 = vector.extract_strided_slice %110 {offsets = [0, 96], sizes = [8, 16], strides = [1, 1]} : vector<8x112xf32> to vector<8x16xf32>
    %115 = arith.addf %18, %114 : vector<8x16xf32>
    %116 = vector.extract_strided_slice %14 {offsets = [16, 0], sizes = [8, 96], strides = [1, 1]} : vector<64x96xf32> to vector<8x96xf32>
    %117 = vector.extract_strided_slice %108 {offsets = [0, 0], sizes = [8, 96], strides = [1, 1]} : vector<8x224xf32> to vector<8x96xf32>
    %118 = vector.extract_strided_slice %116 {offsets = [0, 0], sizes = [8, 32], strides = [1, 1]} : vector<8x96xf32> to vector<8x32xf32>
    %119 = vector.extract_strided_slice %117 {offsets = [0, 0], sizes = [8, 32], strides = [1, 1]} : vector<8x96xf32> to vector<8x32xf32>
    %120 = arith.addf %118, %119 : vector<8x32xf32>
    %121 = arith.negf %120 : vector<8x32xf32>
    %122 = math.exp %121 : vector<8x32xf32>
    %cst_25 = arith.constant 1.000000e+00 : f32
    %123 = vector.broadcast %cst_25 : f32 to vector<8x32xf32>
    %124 = arith.addf %123, %122 : vector<8x32xf32>
    %125 = arith.divf %123, %124 : vector<8x32xf32>
    %126 = vector.extract_strided_slice %116 {offsets = [0, 32], sizes = [8, 32], strides = [1, 1]} : vector<8x96xf32> to vector<8x32xf32>
    %127 = vector.extract_strided_slice %117 {offsets = [0, 32], sizes = [8, 32], strides = [1, 1]} : vector<8x96xf32> to vector<8x32xf32>
    %128 = arith.addf %126, %127 : vector<8x32xf32>
    %129 = arith.negf %128 : vector<8x32xf32>
    %130 = math.exp %129 : vector<8x32xf32>
    %cst_26 = arith.constant 1.000000e+00 : f32
    %131 = vector.broadcast %cst_26 : f32 to vector<8x32xf32>
    %132 = arith.addf %131, %130 : vector<8x32xf32>
    %133 = arith.divf %131, %132 : vector<8x32xf32>
    %134 = vector.extract_strided_slice %116 {offsets = [0, 64], sizes = [8, 32], strides = [1, 1]} : vector<8x96xf32> to vector<8x32xf32>
    %135 = vector.extract_strided_slice %117 {offsets = [0, 64], sizes = [8, 32], strides = [1, 1]} : vector<8x96xf32> to vector<8x32xf32>
    %136 = arith.addf %135, %3 : vector<8x32xf32>
    %137 = arith.mulf %125, %136 : vector<8x32xf32>
    %138 = arith.addf %134, %137 : vector<8x32xf32>
    %139 = math.tanh %138 : vector<8x32xf32>
    %cst_27 = arith.constant 1.000000e+00 : f32
    %140 = vector.broadcast %cst_27 : f32 to vector<8x32xf32>
    %141 = arith.subf %140, %133 : vector<8x32xf32>
    %142 = arith.mulf %141, %139 : vector<8x32xf32>
    %143 = arith.mulf %133, %80 : vector<8x32xf32>
    %144 = arith.addf %142, %143 : vector<8x32xf32>
    %145 = vector.extract_strided_slice %110 {offsets = [0, 0], sizes = [8, 96], strides = [1, 1]} : vector<8x112xf32> to vector<8x96xf32>
    %146 = vector.extract_strided_slice %113 {offsets = [0, 0], sizes = [8, 32], strides = [1, 1]} : vector<8x96xf32> to vector<8x32xf32>
    %147 = vector.extract_strided_slice %145 {offsets = [0, 0], sizes = [8, 32], strides = [1, 1]} : vector<8x96xf32> to vector<8x32xf32>
    %148 = arith.addf %146, %147 : vector<8x32xf32>
    %149 = arith.negf %148 : vector<8x32xf32>
    %150 = math.exp %149 : vector<8x32xf32>
    %cst_28 = arith.constant 1.000000e+00 : f32
    %151 = vector.broadcast %cst_28 : f32 to vector<8x32xf32>
    %152 = arith.addf %151, %150 : vector<8x32xf32>
    %153 = arith.divf %151, %152 : vector<8x32xf32>
    %154 = vector.extract_strided_slice %113 {offsets = [0, 32], sizes = [8, 32], strides = [1, 1]} : vector<8x96xf32> to vector<8x32xf32>
    %155 = vector.extract_strided_slice %145 {offsets = [0, 32], sizes = [8, 32], strides = [1, 1]} : vector<8x96xf32> to vector<8x32xf32>
    %156 = arith.addf %154, %155 : vector<8x32xf32>
    %157 = arith.negf %156 : vector<8x32xf32>
    %158 = math.exp %157 : vector<8x32xf32>
    %cst_29 = arith.constant 1.000000e+00 : f32
    %159 = vector.broadcast %cst_29 : f32 to vector<8x32xf32>
    %160 = arith.addf %159, %158 : vector<8x32xf32>
    %161 = arith.divf %159, %160 : vector<8x32xf32>
    %162 = vector.extract_strided_slice %113 {offsets = [0, 64], sizes = [8, 32], strides = [1, 1]} : vector<8x96xf32> to vector<8x32xf32>
    %163 = vector.extract_strided_slice %145 {offsets = [0, 64], sizes = [8, 32], strides = [1, 1]} : vector<8x96xf32> to vector<8x32xf32>
    %164 = arith.addf %163, %7 : vector<8x32xf32>
    %165 = arith.mulf %153, %164 : vector<8x32xf32>
    %166 = arith.addf %162, %165 : vector<8x32xf32>
    %167 = math.tanh %166 : vector<8x32xf32>
    %cst_30 = arith.constant 1.000000e+00 : f32
    %168 = vector.broadcast %cst_30 : f32 to vector<8x32xf32>
    %169 = arith.subf %168, %161 : vector<8x32xf32>
    %170 = arith.mulf %169, %167 : vector<8x32xf32>
    %171 = arith.mulf %161, %107 : vector<8x32xf32>
    %172 = arith.addf %170, %171 : vector<8x32xf32>
    %cst_31 = arith.constant dense<0.000000e+00> : vector<8x224xf32>
    %173 = tpu.matmul %144, %10, %cst_31 {dimension_numbers = #tpu.dot_dimension_numbers<[1], [0], [0], [1], [0, 0, 1, 1], [], []>} : vector<8x32xf32>, vector<32x224xf32>, vector<8x224xf32> -> vector<8x224xf32>
    %c0_32 = arith.constant 0 : index
    %c384 = arith.constant 384 : index
    %174 = vector.load %arg1[%c0_32, %c384] : memref<32x1408xf32, #tpu.memory_space<vmem>>, vector<32x112xf32>
    %cst_33 = arith.constant dense<0.000000e+00> : vector<8x112xf32>
    %175 = tpu.matmul %172, %174, %cst_33 {dimension_numbers = #tpu.dot_dimension_numbers<[1], [0], [0], [1], [0, 0, 1, 1], [], []>} : vector<8x32xf32>, vector<32x112xf32>, vector<8x112xf32> -> vector<8x112xf32>
    %176 = vector.extract_strided_slice %173 {offsets = [0, 128], sizes = [8, 96], strides = [1, 1]} : vector<8x224xf32> to vector<8x96xf32>
    %177 = vector.broadcast %4 : vector<1x96xf32> to vector<8x96xf32>
    %178 = arith.addf %176, %177 : vector<8x96xf32>
    %179 = vector.extract_strided_slice %175 {offsets = [0, 96], sizes = [8, 16], strides = [1, 1]} : vector<8x112xf32> to vector<8x16xf32>
    %180 = arith.addf %115, %179 : vector<8x16xf32>
    %181 = vector.extract_strided_slice %14 {offsets = [24, 0], sizes = [8, 96], strides = [1, 1]} : vector<64x96xf32> to vector<8x96xf32>
    %182 = vector.extract_strided_slice %173 {offsets = [0, 0], sizes = [8, 96], strides = [1, 1]} : vector<8x224xf32> to vector<8x96xf32>
    %183 = vector.extract_strided_slice %181 {offsets = [0, 0], sizes = [8, 32], strides = [1, 1]} : vector<8x96xf32> to vector<8x32xf32>
    %184 = vector.extract_strided_slice %182 {offsets = [0, 0], sizes = [8, 32], strides = [1, 1]} : vector<8x96xf32> to vector<8x32xf32>
    %185 = arith.addf %183, %184 : vector<8x32xf32>
    %186 = arith.negf %185 : vector<8x32xf32>
    %187 = math.exp %186 : vector<8x32xf32>
    %cst_34 = arith.constant 1.000000e+00 : f32
    %188 = vector.broadcast %cst_34 : f32 to vector<8x32xf32>
    %189 = arith.addf %188, %187 : vector<8x32xf32>
    %190 = arith.divf %188, %189 : vector<8x32xf32>
    %191 = vector.extract_strided_slice %181 {offsets = [0, 32], sizes = [8, 32], strides = [1, 1]} : vector<8x96xf32> to vector<8x32xf32>
    %192 = vector.extract_strided_slice %182 {offsets = [0, 32], sizes = [8, 32], strides = [1, 1]} : vector<8x96xf32> to vector<8x32xf32>
    %193 = arith.addf %191, %192 : vector<8x32xf32>
    %194 = arith.negf %193 : vector<8x32xf32>
    %195 = math.exp %194 : vector<8x32xf32>
    %cst_35 = arith.constant 1.000000e+00 : f32
    %196 = vector.broadcast %cst_35 : f32 to vector<8x32xf32>
    %197 = arith.addf %196, %195 : vector<8x32xf32>
    %198 = arith.divf %196, %197 : vector<8x32xf32>
    %199 = vector.extract_strided_slice %181 {offsets = [0, 64], sizes = [8, 32], strides = [1, 1]} : vector<8x96xf32> to vector<8x32xf32>
    %200 = vector.extract_strided_slice %182 {offsets = [0, 64], sizes = [8, 32], strides = [1, 1]} : vector<8x96xf32> to vector<8x32xf32>
    %201 = arith.addf %200, %3 : vector<8x32xf32>
    %202 = arith.mulf %190, %201 : vector<8x32xf32>
    %203 = arith.addf %199, %202 : vector<8x32xf32>
    %204 = math.tanh %203 : vector<8x32xf32>
    %cst_36 = arith.constant 1.000000e+00 : f32
    %205 = vector.broadcast %cst_36 : f32 to vector<8x32xf32>
    %206 = arith.subf %205, %198 : vector<8x32xf32>
    %207 = arith.mulf %206, %204 : vector<8x32xf32>
    %208 = arith.mulf %198, %144 : vector<8x32xf32>
    %209 = arith.addf %207, %208 : vector<8x32xf32>
    %210 = vector.extract_strided_slice %175 {offsets = [0, 0], sizes = [8, 96], strides = [1, 1]} : vector<8x112xf32> to vector<8x96xf32>
    %211 = vector.extract_strided_slice %178 {offsets = [0, 0], sizes = [8, 32], strides = [1, 1]} : vector<8x96xf32> to vector<8x32xf32>
    %212 = vector.extract_strided_slice %210 {offsets = [0, 0], sizes = [8, 32], strides = [1, 1]} : vector<8x96xf32> to vector<8x32xf32>
    %213 = arith.addf %211, %212 : vector<8x32xf32>
    %214 = arith.negf %213 : vector<8x32xf32>
    %215 = math.exp %214 : vector<8x32xf32>
    %cst_37 = arith.constant 1.000000e+00 : f32
    %216 = vector.broadcast %cst_37 : f32 to vector<8x32xf32>
    %217 = arith.addf %216, %215 : vector<8x32xf32>
    %218 = arith.divf %216, %217 : vector<8x32xf32>
    %219 = vector.extract_strided_slice %178 {offsets = [0, 32], sizes = [8, 32], strides = [1, 1]} : vector<8x96xf32> to vector<8x32xf32>
    %220 = vector.extract_strided_slice %210 {offsets = [0, 32], sizes = [8, 32], strides = [1, 1]} : vector<8x96xf32> to vector<8x32xf32>
    %221 = arith.addf %219, %220 : vector<8x32xf32>
    %222 = arith.negf %221 : vector<8x32xf32>
    %223 = math.exp %222 : vector<8x32xf32>
    %cst_38 = arith.constant 1.000000e+00 : f32
    %224 = vector.broadcast %cst_38 : f32 to vector<8x32xf32>
    %225 = arith.addf %224, %223 : vector<8x32xf32>
    %226 = arith.divf %224, %225 : vector<8x32xf32>
    %227 = vector.extract_strided_slice %178 {offsets = [0, 64], sizes = [8, 32], strides = [1, 1]} : vector<8x96xf32> to vector<8x32xf32>
    %228 = vector.extract_strided_slice %210 {offsets = [0, 64], sizes = [8, 32], strides = [1, 1]} : vector<8x96xf32> to vector<8x32xf32>
    %229 = arith.addf %228, %7 : vector<8x32xf32>
    %230 = arith.mulf %218, %229 : vector<8x32xf32>
    %231 = arith.addf %227, %230 : vector<8x32xf32>
    %232 = math.tanh %231 : vector<8x32xf32>
    %cst_39 = arith.constant 1.000000e+00 : f32
    %233 = vector.broadcast %cst_39 : f32 to vector<8x32xf32>
    %234 = arith.subf %233, %226 : vector<8x32xf32>
    %235 = arith.mulf %234, %232 : vector<8x32xf32>
    %236 = arith.mulf %226, %172 : vector<8x32xf32>
    %237 = arith.addf %235, %236 : vector<8x32xf32>
    %cst_40 = arith.constant dense<0.000000e+00> : vector<8x224xf32>
    %238 = tpu.matmul %209, %10, %cst_40 {dimension_numbers = #tpu.dot_dimension_numbers<[1], [0], [0], [1], [0, 0, 1, 1], [], []>} : vector<8x32xf32>, vector<32x224xf32>, vector<8x224xf32> -> vector<8x224xf32>
    %c0_41 = arith.constant 0 : index
    %c512 = arith.constant 512 : index
    %239 = vector.load %arg1[%c0_41, %c512] : memref<32x1408xf32, #tpu.memory_space<vmem>>, vector<32x112xf32>
    %cst_42 = arith.constant dense<0.000000e+00> : vector<8x112xf32>
    %240 = tpu.matmul %237, %239, %cst_42 {dimension_numbers = #tpu.dot_dimension_numbers<[1], [0], [0], [1], [0, 0, 1, 1], [], []>} : vector<8x32xf32>, vector<32x112xf32>, vector<8x112xf32> -> vector<8x112xf32>
    %241 = vector.extract_strided_slice %238 {offsets = [0, 128], sizes = [8, 96], strides = [1, 1]} : vector<8x224xf32> to vector<8x96xf32>
    %242 = vector.broadcast %4 : vector<1x96xf32> to vector<8x96xf32>
    %243 = arith.addf %241, %242 : vector<8x96xf32>
    %244 = vector.extract_strided_slice %240 {offsets = [0, 96], sizes = [8, 16], strides = [1, 1]} : vector<8x112xf32> to vector<8x16xf32>
    %245 = arith.addf %180, %244 : vector<8x16xf32>
    %246 = vector.extract_strided_slice %14 {offsets = [32, 0], sizes = [8, 96], strides = [1, 1]} : vector<64x96xf32> to vector<8x96xf32>
    %247 = vector.extract_strided_slice %238 {offsets = [0, 0], sizes = [8, 96], strides = [1, 1]} : vector<8x224xf32> to vector<8x96xf32>
    %248 = vector.extract_strided_slice %246 {offsets = [0, 0], sizes = [8, 32], strides = [1, 1]} : vector<8x96xf32> to vector<8x32xf32>
    %249 = vector.extract_strided_slice %247 {offsets = [0, 0], sizes = [8, 32], strides = [1, 1]} : vector<8x96xf32> to vector<8x32xf32>
    %250 = arith.addf %248, %249 : vector<8x32xf32>
    %251 = arith.negf %250 : vector<8x32xf32>
    %252 = math.exp %251 : vector<8x32xf32>
    %cst_43 = arith.constant 1.000000e+00 : f32
    %253 = vector.broadcast %cst_43 : f32 to vector<8x32xf32>
    %254 = arith.addf %253, %252 : vector<8x32xf32>
    %255 = arith.divf %253, %254 : vector<8x32xf32>
    %256 = vector.extract_strided_slice %246 {offsets = [0, 32], sizes = [8, 32], strides = [1, 1]} : vector<8x96xf32> to vector<8x32xf32>
    %257 = vector.extract_strided_slice %247 {offsets = [0, 32], sizes = [8, 32], strides = [1, 1]} : vector<8x96xf32> to vector<8x32xf32>
    %258 = arith.addf %256, %257 : vector<8x32xf32>
    %259 = arith.negf %258 : vector<8x32xf32>
    %260 = math.exp %259 : vector<8x32xf32>
    %cst_44 = arith.constant 1.000000e+00 : f32
    %261 = vector.broadcast %cst_44 : f32 to vector<8x32xf32>
    %262 = arith.addf %261, %260 : vector<8x32xf32>
    %263 = arith.divf %261, %262 : vector<8x32xf32>
    %264 = vector.extract_strided_slice %246 {offsets = [0, 64], sizes = [8, 32], strides = [1, 1]} : vector<8x96xf32> to vector<8x32xf32>
    %265 = vector.extract_strided_slice %247 {offsets = [0, 64], sizes = [8, 32], strides = [1, 1]} : vector<8x96xf32> to vector<8x32xf32>
    %266 = arith.addf %265, %3 : vector<8x32xf32>
    %267 = arith.mulf %255, %266 : vector<8x32xf32>
    %268 = arith.addf %264, %267 : vector<8x32xf32>
    %269 = math.tanh %268 : vector<8x32xf32>
    %cst_45 = arith.constant 1.000000e+00 : f32
    %270 = vector.broadcast %cst_45 : f32 to vector<8x32xf32>
    %271 = arith.subf %270, %263 : vector<8x32xf32>
    %272 = arith.mulf %271, %269 : vector<8x32xf32>
    %273 = arith.mulf %263, %209 : vector<8x32xf32>
    %274 = arith.addf %272, %273 : vector<8x32xf32>
    %275 = vector.extract_strided_slice %240 {offsets = [0, 0], sizes = [8, 96], strides = [1, 1]} : vector<8x112xf32> to vector<8x96xf32>
    %276 = vector.extract_strided_slice %243 {offsets = [0, 0], sizes = [8, 32], strides = [1, 1]} : vector<8x96xf32> to vector<8x32xf32>
    %277 = vector.extract_strided_slice %275 {offsets = [0, 0], sizes = [8, 32], strides = [1, 1]} : vector<8x96xf32> to vector<8x32xf32>
    %278 = arith.addf %276, %277 : vector<8x32xf32>
    %279 = arith.negf %278 : vector<8x32xf32>
    %280 = math.exp %279 : vector<8x32xf32>
    %cst_46 = arith.constant 1.000000e+00 : f32
    %281 = vector.broadcast %cst_46 : f32 to vector<8x32xf32>
    %282 = arith.addf %281, %280 : vector<8x32xf32>
    %283 = arith.divf %281, %282 : vector<8x32xf32>
    %284 = vector.extract_strided_slice %243 {offsets = [0, 32], sizes = [8, 32], strides = [1, 1]} : vector<8x96xf32> to vector<8x32xf32>
    %285 = vector.extract_strided_slice %275 {offsets = [0, 32], sizes = [8, 32], strides = [1, 1]} : vector<8x96xf32> to vector<8x32xf32>
    %286 = arith.addf %284, %285 : vector<8x32xf32>
    %287 = arith.negf %286 : vector<8x32xf32>
    %288 = math.exp %287 : vector<8x32xf32>
    %cst_47 = arith.constant 1.000000e+00 : f32
    %289 = vector.broadcast %cst_47 : f32 to vector<8x32xf32>
    %290 = arith.addf %289, %288 : vector<8x32xf32>
    %291 = arith.divf %289, %290 : vector<8x32xf32>
    %292 = vector.extract_strided_slice %243 {offsets = [0, 64], sizes = [8, 32], strides = [1, 1]} : vector<8x96xf32> to vector<8x32xf32>
    %293 = vector.extract_strided_slice %275 {offsets = [0, 64], sizes = [8, 32], strides = [1, 1]} : vector<8x96xf32> to vector<8x32xf32>
    %294 = arith.addf %293, %7 : vector<8x32xf32>
    %295 = arith.mulf %283, %294 : vector<8x32xf32>
    %296 = arith.addf %292, %295 : vector<8x32xf32>
    %297 = math.tanh %296 : vector<8x32xf32>
    %cst_48 = arith.constant 1.000000e+00 : f32
    %298 = vector.broadcast %cst_48 : f32 to vector<8x32xf32>
    %299 = arith.subf %298, %291 : vector<8x32xf32>
    %300 = arith.mulf %299, %297 : vector<8x32xf32>
    %301 = arith.mulf %291, %237 : vector<8x32xf32>
    %302 = arith.addf %300, %301 : vector<8x32xf32>
    %cst_49 = arith.constant dense<0.000000e+00> : vector<8x224xf32>
    %303 = tpu.matmul %274, %10, %cst_49 {dimension_numbers = #tpu.dot_dimension_numbers<[1], [0], [0], [1], [0, 0, 1, 1], [], []>} : vector<8x32xf32>, vector<32x224xf32>, vector<8x224xf32> -> vector<8x224xf32>
    %c0_50 = arith.constant 0 : index
    %c640 = arith.constant 640 : index
    %304 = vector.load %arg1[%c0_50, %c640] : memref<32x1408xf32, #tpu.memory_space<vmem>>, vector<32x112xf32>
    %cst_51 = arith.constant dense<0.000000e+00> : vector<8x112xf32>
    %305 = tpu.matmul %302, %304, %cst_51 {dimension_numbers = #tpu.dot_dimension_numbers<[1], [0], [0], [1], [0, 0, 1, 1], [], []>} : vector<8x32xf32>, vector<32x112xf32>, vector<8x112xf32> -> vector<8x112xf32>
    %306 = vector.extract_strided_slice %303 {offsets = [0, 128], sizes = [8, 96], strides = [1, 1]} : vector<8x224xf32> to vector<8x96xf32>
    %307 = vector.broadcast %4 : vector<1x96xf32> to vector<8x96xf32>
    %308 = arith.addf %306, %307 : vector<8x96xf32>
    %309 = vector.extract_strided_slice %305 {offsets = [0, 96], sizes = [8, 16], strides = [1, 1]} : vector<8x112xf32> to vector<8x16xf32>
    %310 = arith.addf %245, %309 : vector<8x16xf32>
    %311 = vector.extract_strided_slice %14 {offsets = [40, 0], sizes = [8, 96], strides = [1, 1]} : vector<64x96xf32> to vector<8x96xf32>
    %312 = vector.extract_strided_slice %303 {offsets = [0, 0], sizes = [8, 96], strides = [1, 1]} : vector<8x224xf32> to vector<8x96xf32>
    %313 = vector.extract_strided_slice %311 {offsets = [0, 0], sizes = [8, 32], strides = [1, 1]} : vector<8x96xf32> to vector<8x32xf32>
    %314 = vector.extract_strided_slice %312 {offsets = [0, 0], sizes = [8, 32], strides = [1, 1]} : vector<8x96xf32> to vector<8x32xf32>
    %315 = arith.addf %313, %314 : vector<8x32xf32>
    %316 = arith.negf %315 : vector<8x32xf32>
    %317 = math.exp %316 : vector<8x32xf32>
    %cst_52 = arith.constant 1.000000e+00 : f32
    %318 = vector.broadcast %cst_52 : f32 to vector<8x32xf32>
    %319 = arith.addf %318, %317 : vector<8x32xf32>
    %320 = arith.divf %318, %319 : vector<8x32xf32>
    %321 = vector.extract_strided_slice %311 {offsets = [0, 32], sizes = [8, 32], strides = [1, 1]} : vector<8x96xf32> to vector<8x32xf32>
    %322 = vector.extract_strided_slice %312 {offsets = [0, 32], sizes = [8, 32], strides = [1, 1]} : vector<8x96xf32> to vector<8x32xf32>
    %323 = arith.addf %321, %322 : vector<8x32xf32>
    %324 = arith.negf %323 : vector<8x32xf32>
    %325 = math.exp %324 : vector<8x32xf32>
    %cst_53 = arith.constant 1.000000e+00 : f32
    %326 = vector.broadcast %cst_53 : f32 to vector<8x32xf32>
    %327 = arith.addf %326, %325 : vector<8x32xf32>
    %328 = arith.divf %326, %327 : vector<8x32xf32>
    %329 = vector.extract_strided_slice %311 {offsets = [0, 64], sizes = [8, 32], strides = [1, 1]} : vector<8x96xf32> to vector<8x32xf32>
    %330 = vector.extract_strided_slice %312 {offsets = [0, 64], sizes = [8, 32], strides = [1, 1]} : vector<8x96xf32> to vector<8x32xf32>
    %331 = arith.addf %330, %3 : vector<8x32xf32>
    %332 = arith.mulf %320, %331 : vector<8x32xf32>
    %333 = arith.addf %329, %332 : vector<8x32xf32>
    %334 = math.tanh %333 : vector<8x32xf32>
    %cst_54 = arith.constant 1.000000e+00 : f32
    %335 = vector.broadcast %cst_54 : f32 to vector<8x32xf32>
    %336 = arith.subf %335, %328 : vector<8x32xf32>
    %337 = arith.mulf %336, %334 : vector<8x32xf32>
    %338 = arith.mulf %328, %274 : vector<8x32xf32>
    %339 = arith.addf %337, %338 : vector<8x32xf32>
    %340 = vector.extract_strided_slice %305 {offsets = [0, 0], sizes = [8, 96], strides = [1, 1]} : vector<8x112xf32> to vector<8x96xf32>
    %341 = vector.extract_strided_slice %308 {offsets = [0, 0], sizes = [8, 32], strides = [1, 1]} : vector<8x96xf32> to vector<8x32xf32>
    %342 = vector.extract_strided_slice %340 {offsets = [0, 0], sizes = [8, 32], strides = [1, 1]} : vector<8x96xf32> to vector<8x32xf32>
    %343 = arith.addf %341, %342 : vector<8x32xf32>
    %344 = arith.negf %343 : vector<8x32xf32>
    %345 = math.exp %344 : vector<8x32xf32>
    %cst_55 = arith.constant 1.000000e+00 : f32
    %346 = vector.broadcast %cst_55 : f32 to vector<8x32xf32>
    %347 = arith.addf %346, %345 : vector<8x32xf32>
    %348 = arith.divf %346, %347 : vector<8x32xf32>
    %349 = vector.extract_strided_slice %308 {offsets = [0, 32], sizes = [8, 32], strides = [1, 1]} : vector<8x96xf32> to vector<8x32xf32>
    %350 = vector.extract_strided_slice %340 {offsets = [0, 32], sizes = [8, 32], strides = [1, 1]} : vector<8x96xf32> to vector<8x32xf32>
    %351 = arith.addf %349, %350 : vector<8x32xf32>
    %352 = arith.negf %351 : vector<8x32xf32>
    %353 = math.exp %352 : vector<8x32xf32>
    %cst_56 = arith.constant 1.000000e+00 : f32
    %354 = vector.broadcast %cst_56 : f32 to vector<8x32xf32>
    %355 = arith.addf %354, %353 : vector<8x32xf32>
    %356 = arith.divf %354, %355 : vector<8x32xf32>
    %357 = vector.extract_strided_slice %308 {offsets = [0, 64], sizes = [8, 32], strides = [1, 1]} : vector<8x96xf32> to vector<8x32xf32>
    %358 = vector.extract_strided_slice %340 {offsets = [0, 64], sizes = [8, 32], strides = [1, 1]} : vector<8x96xf32> to vector<8x32xf32>
    %359 = arith.addf %358, %7 : vector<8x32xf32>
    %360 = arith.mulf %348, %359 : vector<8x32xf32>
    %361 = arith.addf %357, %360 : vector<8x32xf32>
    %362 = math.tanh %361 : vector<8x32xf32>
    %cst_57 = arith.constant 1.000000e+00 : f32
    %363 = vector.broadcast %cst_57 : f32 to vector<8x32xf32>
    %364 = arith.subf %363, %356 : vector<8x32xf32>
    %365 = arith.mulf %364, %362 : vector<8x32xf32>
    %366 = arith.mulf %356, %302 : vector<8x32xf32>
    %367 = arith.addf %365, %366 : vector<8x32xf32>
    %cst_58 = arith.constant dense<0.000000e+00> : vector<8x224xf32>
    %368 = tpu.matmul %339, %10, %cst_58 {dimension_numbers = #tpu.dot_dimension_numbers<[1], [0], [0], [1], [0, 0, 1, 1], [], []>} : vector<8x32xf32>, vector<32x224xf32>, vector<8x224xf32> -> vector<8x224xf32>
    %c0_59 = arith.constant 0 : index
    %c768 = arith.constant 768 : index
    %369 = vector.load %arg1[%c0_59, %c768] : memref<32x1408xf32, #tpu.memory_space<vmem>>, vector<32x112xf32>
    %cst_60 = arith.constant dense<0.000000e+00> : vector<8x112xf32>
    %370 = tpu.matmul %367, %369, %cst_60 {dimension_numbers = #tpu.dot_dimension_numbers<[1], [0], [0], [1], [0, 0, 1, 1], [], []>} : vector<8x32xf32>, vector<32x112xf32>, vector<8x112xf32> -> vector<8x112xf32>
    %371 = vector.extract_strided_slice %368 {offsets = [0, 128], sizes = [8, 96], strides = [1, 1]} : vector<8x224xf32> to vector<8x96xf32>
    %372 = vector.broadcast %4 : vector<1x96xf32> to vector<8x96xf32>
    %373 = arith.addf %371, %372 : vector<8x96xf32>
    %374 = vector.extract_strided_slice %370 {offsets = [0, 96], sizes = [8, 16], strides = [1, 1]} : vector<8x112xf32> to vector<8x16xf32>
    %375 = arith.addf %310, %374 : vector<8x16xf32>
    %376 = vector.extract_strided_slice %14 {offsets = [48, 0], sizes = [8, 96], strides = [1, 1]} : vector<64x96xf32> to vector<8x96xf32>
    %377 = vector.extract_strided_slice %368 {offsets = [0, 0], sizes = [8, 96], strides = [1, 1]} : vector<8x224xf32> to vector<8x96xf32>
    %378 = vector.extract_strided_slice %376 {offsets = [0, 0], sizes = [8, 32], strides = [1, 1]} : vector<8x96xf32> to vector<8x32xf32>
    %379 = vector.extract_strided_slice %377 {offsets = [0, 0], sizes = [8, 32], strides = [1, 1]} : vector<8x96xf32> to vector<8x32xf32>
    %380 = arith.addf %378, %379 : vector<8x32xf32>
    %381 = arith.negf %380 : vector<8x32xf32>
    %382 = math.exp %381 : vector<8x32xf32>
    %cst_61 = arith.constant 1.000000e+00 : f32
    %383 = vector.broadcast %cst_61 : f32 to vector<8x32xf32>
    %384 = arith.addf %383, %382 : vector<8x32xf32>
    %385 = arith.divf %383, %384 : vector<8x32xf32>
    %386 = vector.extract_strided_slice %376 {offsets = [0, 32], sizes = [8, 32], strides = [1, 1]} : vector<8x96xf32> to vector<8x32xf32>
    %387 = vector.extract_strided_slice %377 {offsets = [0, 32], sizes = [8, 32], strides = [1, 1]} : vector<8x96xf32> to vector<8x32xf32>
    %388 = arith.addf %386, %387 : vector<8x32xf32>
    %389 = arith.negf %388 : vector<8x32xf32>
    %390 = math.exp %389 : vector<8x32xf32>
    %cst_62 = arith.constant 1.000000e+00 : f32
    %391 = vector.broadcast %cst_62 : f32 to vector<8x32xf32>
    %392 = arith.addf %391, %390 : vector<8x32xf32>
    %393 = arith.divf %391, %392 : vector<8x32xf32>
    %394 = vector.extract_strided_slice %376 {offsets = [0, 64], sizes = [8, 32], strides = [1, 1]} : vector<8x96xf32> to vector<8x32xf32>
    %395 = vector.extract_strided_slice %377 {offsets = [0, 64], sizes = [8, 32], strides = [1, 1]} : vector<8x96xf32> to vector<8x32xf32>
    %396 = arith.addf %395, %3 : vector<8x32xf32>
    %397 = arith.mulf %385, %396 : vector<8x32xf32>
    %398 = arith.addf %394, %397 : vector<8x32xf32>
    %399 = math.tanh %398 : vector<8x32xf32>
    %cst_63 = arith.constant 1.000000e+00 : f32
    %400 = vector.broadcast %cst_63 : f32 to vector<8x32xf32>
    %401 = arith.subf %400, %393 : vector<8x32xf32>
    %402 = arith.mulf %401, %399 : vector<8x32xf32>
    %403 = arith.mulf %393, %339 : vector<8x32xf32>
    %404 = arith.addf %402, %403 : vector<8x32xf32>
    %405 = vector.extract_strided_slice %370 {offsets = [0, 0], sizes = [8, 96], strides = [1, 1]} : vector<8x112xf32> to vector<8x96xf32>
    %406 = vector.extract_strided_slice %373 {offsets = [0, 0], sizes = [8, 32], strides = [1, 1]} : vector<8x96xf32> to vector<8x32xf32>
    %407 = vector.extract_strided_slice %405 {offsets = [0, 0], sizes = [8, 32], strides = [1, 1]} : vector<8x96xf32> to vector<8x32xf32>
    %408 = arith.addf %406, %407 : vector<8x32xf32>
    %409 = arith.negf %408 : vector<8x32xf32>
    %410 = math.exp %409 : vector<8x32xf32>
    %cst_64 = arith.constant 1.000000e+00 : f32
    %411 = vector.broadcast %cst_64 : f32 to vector<8x32xf32>
    %412 = arith.addf %411, %410 : vector<8x32xf32>
    %413 = arith.divf %411, %412 : vector<8x32xf32>
    %414 = vector.extract_strided_slice %373 {offsets = [0, 32], sizes = [8, 32], strides = [1, 1]} : vector<8x96xf32> to vector<8x32xf32>
    %415 = vector.extract_strided_slice %405 {offsets = [0, 32], sizes = [8, 32], strides = [1, 1]} : vector<8x96xf32> to vector<8x32xf32>
    %416 = arith.addf %414, %415 : vector<8x32xf32>
    %417 = arith.negf %416 : vector<8x32xf32>
    %418 = math.exp %417 : vector<8x32xf32>
    %cst_65 = arith.constant 1.000000e+00 : f32
    %419 = vector.broadcast %cst_65 : f32 to vector<8x32xf32>
    %420 = arith.addf %419, %418 : vector<8x32xf32>
    %421 = arith.divf %419, %420 : vector<8x32xf32>
    %422 = vector.extract_strided_slice %373 {offsets = [0, 64], sizes = [8, 32], strides = [1, 1]} : vector<8x96xf32> to vector<8x32xf32>
    %423 = vector.extract_strided_slice %405 {offsets = [0, 64], sizes = [8, 32], strides = [1, 1]} : vector<8x96xf32> to vector<8x32xf32>
    %424 = arith.addf %423, %7 : vector<8x32xf32>
    %425 = arith.mulf %413, %424 : vector<8x32xf32>
    %426 = arith.addf %422, %425 : vector<8x32xf32>
    %427 = math.tanh %426 : vector<8x32xf32>
    %cst_66 = arith.constant 1.000000e+00 : f32
    %428 = vector.broadcast %cst_66 : f32 to vector<8x32xf32>
    %429 = arith.subf %428, %421 : vector<8x32xf32>
    %430 = arith.mulf %429, %427 : vector<8x32xf32>
    %431 = arith.mulf %421, %367 : vector<8x32xf32>
    %432 = arith.addf %430, %431 : vector<8x32xf32>
    %cst_67 = arith.constant dense<0.000000e+00> : vector<8x224xf32>
    %433 = tpu.matmul %404, %10, %cst_67 {dimension_numbers = #tpu.dot_dimension_numbers<[1], [0], [0], [1], [0, 0, 1, 1], [], []>} : vector<8x32xf32>, vector<32x224xf32>, vector<8x224xf32> -> vector<8x224xf32>
    %c0_68 = arith.constant 0 : index
    %c896 = arith.constant 896 : index
    %434 = vector.load %arg1[%c0_68, %c896] : memref<32x1408xf32, #tpu.memory_space<vmem>>, vector<32x112xf32>
    %cst_69 = arith.constant dense<0.000000e+00> : vector<8x112xf32>
    %435 = tpu.matmul %432, %434, %cst_69 {dimension_numbers = #tpu.dot_dimension_numbers<[1], [0], [0], [1], [0, 0, 1, 1], [], []>} : vector<8x32xf32>, vector<32x112xf32>, vector<8x112xf32> -> vector<8x112xf32>
    %436 = vector.extract_strided_slice %433 {offsets = [0, 128], sizes = [8, 96], strides = [1, 1]} : vector<8x224xf32> to vector<8x96xf32>
    %437 = vector.broadcast %4 : vector<1x96xf32> to vector<8x96xf32>
    %438 = arith.addf %436, %437 : vector<8x96xf32>
    %439 = vector.extract_strided_slice %435 {offsets = [0, 96], sizes = [8, 16], strides = [1, 1]} : vector<8x112xf32> to vector<8x16xf32>
    %440 = arith.addf %375, %439 : vector<8x16xf32>
    %441 = vector.extract_strided_slice %14 {offsets = [56, 0], sizes = [8, 96], strides = [1, 1]} : vector<64x96xf32> to vector<8x96xf32>
    %442 = vector.extract_strided_slice %433 {offsets = [0, 0], sizes = [8, 96], strides = [1, 1]} : vector<8x224xf32> to vector<8x96xf32>
    %443 = vector.extract_strided_slice %441 {offsets = [0, 0], sizes = [8, 32], strides = [1, 1]} : vector<8x96xf32> to vector<8x32xf32>
    %444 = vector.extract_strided_slice %442 {offsets = [0, 0], sizes = [8, 32], strides = [1, 1]} : vector<8x96xf32> to vector<8x32xf32>
    %445 = arith.addf %443, %444 : vector<8x32xf32>
    %446 = arith.negf %445 : vector<8x32xf32>
    %447 = math.exp %446 : vector<8x32xf32>
    %cst_70 = arith.constant 1.000000e+00 : f32
    %448 = vector.broadcast %cst_70 : f32 to vector<8x32xf32>
    %449 = arith.addf %448, %447 : vector<8x32xf32>
    %450 = arith.divf %448, %449 : vector<8x32xf32>
    %451 = vector.extract_strided_slice %441 {offsets = [0, 32], sizes = [8, 32], strides = [1, 1]} : vector<8x96xf32> to vector<8x32xf32>
    %452 = vector.extract_strided_slice %442 {offsets = [0, 32], sizes = [8, 32], strides = [1, 1]} : vector<8x96xf32> to vector<8x32xf32>
    %453 = arith.addf %451, %452 : vector<8x32xf32>
    %454 = arith.negf %453 : vector<8x32xf32>
    %455 = math.exp %454 : vector<8x32xf32>
    %cst_71 = arith.constant 1.000000e+00 : f32
    %456 = vector.broadcast %cst_71 : f32 to vector<8x32xf32>
    %457 = arith.addf %456, %455 : vector<8x32xf32>
    %458 = arith.divf %456, %457 : vector<8x32xf32>
    %459 = vector.extract_strided_slice %441 {offsets = [0, 64], sizes = [8, 32], strides = [1, 1]} : vector<8x96xf32> to vector<8x32xf32>
    %460 = vector.extract_strided_slice %442 {offsets = [0, 64], sizes = [8, 32], strides = [1, 1]} : vector<8x96xf32> to vector<8x32xf32>
    %461 = arith.addf %460, %3 : vector<8x32xf32>
    %462 = arith.mulf %450, %461 : vector<8x32xf32>
    %463 = arith.addf %459, %462 : vector<8x32xf32>
    %464 = math.tanh %463 : vector<8x32xf32>
    %cst_72 = arith.constant 1.000000e+00 : f32
    %465 = vector.broadcast %cst_72 : f32 to vector<8x32xf32>
    %466 = arith.subf %465, %458 : vector<8x32xf32>
    %467 = arith.mulf %466, %464 : vector<8x32xf32>
    %468 = arith.mulf %458, %404 : vector<8x32xf32>
    %469 = arith.addf %467, %468 : vector<8x32xf32>
    %470 = vector.extract_strided_slice %435 {offsets = [0, 0], sizes = [8, 96], strides = [1, 1]} : vector<8x112xf32> to vector<8x96xf32>
    %471 = vector.extract_strided_slice %438 {offsets = [0, 0], sizes = [8, 32], strides = [1, 1]} : vector<8x96xf32> to vector<8x32xf32>
    %472 = vector.extract_strided_slice %470 {offsets = [0, 0], sizes = [8, 32], strides = [1, 1]} : vector<8x96xf32> to vector<8x32xf32>
    %473 = arith.addf %471, %472 : vector<8x32xf32>
    %474 = arith.negf %473 : vector<8x32xf32>
    %475 = math.exp %474 : vector<8x32xf32>
    %cst_73 = arith.constant 1.000000e+00 : f32
    %476 = vector.broadcast %cst_73 : f32 to vector<8x32xf32>
    %477 = arith.addf %476, %475 : vector<8x32xf32>
    %478 = arith.divf %476, %477 : vector<8x32xf32>
    %479 = vector.extract_strided_slice %438 {offsets = [0, 32], sizes = [8, 32], strides = [1, 1]} : vector<8x96xf32> to vector<8x32xf32>
    %480 = vector.extract_strided_slice %470 {offsets = [0, 32], sizes = [8, 32], strides = [1, 1]} : vector<8x96xf32> to vector<8x32xf32>
    %481 = arith.addf %479, %480 : vector<8x32xf32>
    %482 = arith.negf %481 : vector<8x32xf32>
    %483 = math.exp %482 : vector<8x32xf32>
    %cst_74 = arith.constant 1.000000e+00 : f32
    %484 = vector.broadcast %cst_74 : f32 to vector<8x32xf32>
    %485 = arith.addf %484, %483 : vector<8x32xf32>
    %486 = arith.divf %484, %485 : vector<8x32xf32>
    %487 = vector.extract_strided_slice %438 {offsets = [0, 64], sizes = [8, 32], strides = [1, 1]} : vector<8x96xf32> to vector<8x32xf32>
    %488 = vector.extract_strided_slice %470 {offsets = [0, 64], sizes = [8, 32], strides = [1, 1]} : vector<8x96xf32> to vector<8x32xf32>
    %489 = arith.addf %488, %7 : vector<8x32xf32>
    %490 = arith.mulf %478, %489 : vector<8x32xf32>
    %491 = arith.addf %487, %490 : vector<8x32xf32>
    %492 = math.tanh %491 : vector<8x32xf32>
    %cst_75 = arith.constant 1.000000e+00 : f32
    %493 = vector.broadcast %cst_75 : f32 to vector<8x32xf32>
    %494 = arith.subf %493, %486 : vector<8x32xf32>
    %495 = arith.mulf %494, %492 : vector<8x32xf32>
    %496 = arith.mulf %486, %432 : vector<8x32xf32>
    %497 = arith.addf %495, %496 : vector<8x32xf32>
    %cst_76 = arith.constant dense<0.000000e+00> : vector<8x224xf32>
    %498 = tpu.matmul %469, %10, %cst_76 {dimension_numbers = #tpu.dot_dimension_numbers<[1], [0], [0], [1], [0, 0, 1, 1], [], []>} : vector<8x32xf32>, vector<32x224xf32>, vector<8x224xf32> -> vector<8x224xf32>
    %c0_77 = arith.constant 0 : index
    %c1024 = arith.constant 1024 : index
    %499 = vector.load %arg1[%c0_77, %c1024] : memref<32x1408xf32, #tpu.memory_space<vmem>>, vector<32x112xf32>
    %cst_78 = arith.constant dense<0.000000e+00> : vector<8x112xf32>
    %500 = tpu.matmul %497, %499, %cst_78 {dimension_numbers = #tpu.dot_dimension_numbers<[1], [0], [0], [1], [0, 0, 1, 1], [], []>} : vector<8x32xf32>, vector<32x112xf32>, vector<8x112xf32> -> vector<8x112xf32>
    %501 = vector.extract_strided_slice %498 {offsets = [0, 128], sizes = [8, 96], strides = [1, 1]} : vector<8x224xf32> to vector<8x96xf32>
    %502 = vector.broadcast %4 : vector<1x96xf32> to vector<8x96xf32>
    %503 = arith.addf %501, %502 : vector<8x96xf32>
    %504 = vector.extract_strided_slice %500 {offsets = [0, 96], sizes = [8, 16], strides = [1, 1]} : vector<8x112xf32> to vector<8x16xf32>
    %505 = arith.addf %440, %504 : vector<8x16xf32>
    %506 = vector.extract_strided_slice %500 {offsets = [0, 0], sizes = [8, 96], strides = [1, 1]} : vector<8x112xf32> to vector<8x96xf32>
    %507 = vector.extract_strided_slice %503 {offsets = [0, 0], sizes = [8, 32], strides = [1, 1]} : vector<8x96xf32> to vector<8x32xf32>
    %508 = vector.extract_strided_slice %506 {offsets = [0, 0], sizes = [8, 32], strides = [1, 1]} : vector<8x96xf32> to vector<8x32xf32>
    %509 = arith.addf %507, %508 : vector<8x32xf32>
    %510 = arith.negf %509 : vector<8x32xf32>
    %511 = math.exp %510 : vector<8x32xf32>
    %cst_79 = arith.constant 1.000000e+00 : f32
    %512 = vector.broadcast %cst_79 : f32 to vector<8x32xf32>
    %513 = arith.addf %512, %511 : vector<8x32xf32>
    %514 = arith.divf %512, %513 : vector<8x32xf32>
    %515 = vector.extract_strided_slice %503 {offsets = [0, 32], sizes = [8, 32], strides = [1, 1]} : vector<8x96xf32> to vector<8x32xf32>
    %516 = vector.extract_strided_slice %506 {offsets = [0, 32], sizes = [8, 32], strides = [1, 1]} : vector<8x96xf32> to vector<8x32xf32>
    %517 = arith.addf %515, %516 : vector<8x32xf32>
    %518 = arith.negf %517 : vector<8x32xf32>
    %519 = math.exp %518 : vector<8x32xf32>
    %cst_80 = arith.constant 1.000000e+00 : f32
    %520 = vector.broadcast %cst_80 : f32 to vector<8x32xf32>
    %521 = arith.addf %520, %519 : vector<8x32xf32>
    %522 = arith.divf %520, %521 : vector<8x32xf32>
    %523 = vector.extract_strided_slice %503 {offsets = [0, 64], sizes = [8, 32], strides = [1, 1]} : vector<8x96xf32> to vector<8x32xf32>
    %524 = vector.extract_strided_slice %506 {offsets = [0, 64], sizes = [8, 32], strides = [1, 1]} : vector<8x96xf32> to vector<8x32xf32>
    %525 = arith.addf %524, %7 : vector<8x32xf32>
    %526 = arith.mulf %514, %525 : vector<8x32xf32>
    %527 = arith.addf %523, %526 : vector<8x32xf32>
    %528 = math.tanh %527 : vector<8x32xf32>
    %cst_81 = arith.constant 1.000000e+00 : f32
    %529 = vector.broadcast %cst_81 : f32 to vector<8x32xf32>
    %530 = arith.subf %529, %522 : vector<8x32xf32>
    %531 = arith.mulf %530, %528 : vector<8x32xf32>
    %532 = arith.mulf %522, %497 : vector<8x32xf32>
    %533 = arith.addf %531, %532 : vector<8x32xf32>
    %c0_82 = arith.constant 0 : index
    %c1248 = arith.constant 1248 : index
    %534 = vector.load %arg1[%c0_82, %c1248] : memref<32x1408xf32, #tpu.memory_space<vmem>>, vector<32x16xf32>
    %cst_83 = arith.constant dense<0.000000e+00> : vector<8x16xf32>
    %535 = tpu.matmul %533, %534, %cst_83 {dimension_numbers = #tpu.dot_dimension_numbers<[1], [0], [0], [1], [0, 0, 1, 1], [], []>} : vector<8x32xf32>, vector<32x16xf32>, vector<8x16xf32> -> vector<8x16xf32>
    %536 = arith.addf %505, %535 : vector<8x16xf32>
    %c0_84 = arith.constant 0 : index
    %c0_85 = arith.constant 0 : index
    %537 = vector.load %arg2[%c0_84, %c0_85] : memref<8x16xf32, #tpu.memory_space<vmem>>, vector<8x16xf32>
    tpu.vector_store %arg2[%c0_84, %c0_85], %536 {strides = array<i32>} : memref<8x16xf32, #tpu.memory_space<vmem>>, vector<8x16xf32>,
    return
  }
}

</mosaic_0001>

<llo_original>
// kernel: tpu_custom_call.1
$region0: #{tpu_custom_call.1}
  #allocation0 [shape = 'u32[]', space=smem, size = 0x4, offset = 0x4, fixed_abs, tag = 'smem constant byte address 0x4 - core index']
  #allocation1 [shape = 'u32[72,128]{1,0:T(1,128)}', space=vmem, size = 0x9000, scoped, tag = 'internal scratch']
  %s0 = inlined_call_operand.vmem [shape: f32[64,8], index: 0, kind: input, shape index: {}]
  %s1 = inlined_call_operand.hbm [shape: f32[32,1408], index: 1, kind: input, shape index: {}]
  %s2 = inlined_call_operand.hbm [shape: f32[8,16], index: 2, kind: output, shape index: {}]
  %s3 = sld [smem:[#allocation0]]
  $region22: #{tpu_custom_call.1} parent=0
    _
  %s5 = ssub.s32 1, %s3
  %s6 = scalar_select 0, %s5, %s3
  $region1: #{tpu_custom_call.1} parent=0
    #allocation2 [shape = 'u8[180224]{0}', space=vmem, size = 0x2c000, scoped, tag = 'input window, operand 1, single buffered']
    #allocation3 [shape = 's32[1]{0}', space=sflag, size = 0x4, scoped, tag = 'scoped memory for tpu_custom_call.1']
    #allocation4 [shape = 's32[1]{0}', space=sflag, size = 0x4, scoped, tag = 'scoped memory for tpu_custom_call.1']
    #allocation5 [shape = 'u8[4096]{0}', space=vmem, size = 0x1000, scoped, tag = 'output window, operand 0, single buffered']
    %7 = vsyncpa [#allocation3], 0
    %8 = vsyncpa [#allocation4], 0
    // Predicated region
    $region2: #{tpu_custom_call.1} parent=1 // pred_check
      _
    $region3: #{tpu_custom_call.1} parent=1 // pred_check_branch
      %10 = sbr.rel (0) target = $region5
    $region4: #{tpu_custom_call.1} parent=1 // pred_region
      _
    $region5: #{tpu_custom_call.1} parent=1 // pred_fallthru
      _
    // Predicated region
    $region6: #{tpu_custom_call.1} parent=1 // pred_check
      _
    $region7: #{tpu_custom_call.1} parent=1 // pred_check_branch
      %12 = sbr.rel (0) target = $region9
    $region8: #{tpu_custom_call.1} parent=1 // pred_region
      %14 = vsyncadd [#allocation3], 0
      %s15 = sshll.u32 %s1, 4
      %s16 = int_to_ptr.hbm [resolvable:$true] %s15
      %s17 = sshll.u32 [#allocation2], 4
      %s18 = int_to_ptr.vmem [resolvable:$true] %s17
      %23 = dma.hbm_to_vmem [thread:$0]  %s16, 5632, %s18, [#allocation3], 1408, 1408, 88
    $region9: #{tpu_custom_call.1} parent=1 // pred_fallthru
      _
    // Predicated region
    $region10: #{tpu_custom_call.1} parent=1 // pred_check
      _
    $region11: #{tpu_custom_call.1} parent=1 // pred_check_branch
      %25 = sbr.rel (0) target = $region13
    $region12: #{tpu_custom_call.1} parent=1 // pred_region
      %27 = dma.done [#allocation3], 5632
    $region13: #{tpu_custom_call.1} parent=1 // pred_fallthru
      _
    %v28 = vld [vmem:[#allocation2 + $0xa8] ss:$0 sm:$0xff]
    %v29 = vld [vmem:[#allocation2 + $0xa9] ss:$0 sm:$0xff]
    %v30 = vld [vmem:[#allocation2 + $0xaa] ss:$0 sm:$0xff]
    %v31 = vld [vmem:[#allocation2 + $0xab] ss:$0 sm:$0xff]
    %v32 = vld [vmem:[#allocation2 + $0x50] sm:$0xff]
    %v33 = vld [vmem:[#allocation2 + $0xac] ss:$0 sm:$0xff]
    %v34 = vld [vmem:[#allocation2] sm:$0xff]
    %v35 = vld [vmem:[#allocation2 + $0x8] sm:$0xff]
    %v36 = vld [vmem:[#allocation2 + $0x58] sm:$0xff]
    %v37 = vld [vmem:[#allocation2 + $0x60] sm:$0xff]
    %v38 = vld [vmem:[#allocation2 + $0xb0] sm:$0xff]
    %v39 = vld [vmem:[#allocation2 + $0xb8] sm:$0xff]
    %v40 = vld [vmem:[#allocation2 + $0x108] sm:$0xff]
    %v41 = vld [vmem:[#allocation2 + $0x110] sm:$0xff]
    %v42 = vld [vmem:[%s0] sm:$0xff]
    %v43 = vld [vmem:[%s0 + $0x8] sm:$0xff]
    %v44 = vld [vmem:[%s0 + $0x10] sm:$0xff]
    %v45 = vld [vmem:[%s0 + $0x18] sm:$0xff]
    %v46 = vld [vmem:[%s0 + $0x20] sm:$0xff]
    %v47 = vld [vmem:[%s0 + $0x28] sm:$0xff]
    %v48 = vld [vmem:[%s0 + $0x30] sm:$0xff]
    %v49 = vld [vmem:[%s0 + $0x38] sm:$0xff]
    %vm50 = vcmask 64512
    %v52 = vsel %vm50, %v42, 0
    %v55 = vsel %vm50, %v43, 0
    %v58 = vsel %vm50, %v44, 0
    %v61 = vsel %vm50, %v45, 0
    %v64 = vsel %vm50, %v46, 0
    %v67 = vsel %vm50, %v47, 0
    %v70 = vsel %vm50, %v48, 0
    %v73 = vsel %vm50, %v49, 0
    %75 = vmatpush.msra.mxu0 0.0
    %76 = vmatpush.msra.mxu0 0.0
    %77 = vmatpush.msra.mxu0 0.0
    %78 = vmatpush.msra.mxu0 0.0
    %79 = vmatpush.msra.mxu0 0.0
    %80 = vmatpush.msra.mxu0 0.0
    %81 = vmatpush.msra.mxu0 0.0
    %82 = vmatpush.msra.mxu0 0.0
    %83 = vmatpush.msra.mxu0 0.0
    %84 = vmatpush.msra.mxu0 0.0
    %85 = vmatpush.msra.mxu0 0.0
    %86 = vmatpush.msra.mxu0 0.0
    %87 = vmatpush.msra.mxu0 0.0
    %88 = vmatpush.msra.mxu0 0.0
    %89 = vmatpush.msra.mxu0 0.0
    %90 = vmatpush.msra.mxu0 %v32
    %91 = vmatmul.f32.gmra.mxu0 %v52
    %v92 = vpop.f32.mrf.mxu0
    %v93 = vadd.f32 %v28, %v92
    %94 = vmatmul.f32.gmra.mxu0 %v55
    %v95 = vpop.f32.mrf.mxu0
    %v96 = vadd.f32 %v28, %v95
    %97 = vmatmul.f32.gmra.mxu0 %v58
    %v98 = vpop.f32.mrf.mxu0
    %v99 = vadd.f32 %v28, %v98
    %100 = vmatmul.f32.gmra.mxu0 %v61
    %v101 = vpop.f32.mrf.mxu0
    %v102 = vadd.f32 %v28, %v101
    %103 = vmatmul.f32.gmra.mxu0 %v64
    %v104 = vpop.f32.mrf.mxu0
    %v105 = vadd.f32 %v28, %v104
    %106 = vmatmul.f32.gmra.mxu0 %v67
    %v107 = vpop.f32.mrf.mxu0
    %v108 = vadd.f32 %v28, %v107
    %109 = vmatmul.f32.gmra.mxu0 %v70
    %v110 = vpop.f32.mrf.mxu0
    %v111 = vadd.f32 %v28, %v110
    %112 = vmatmul.f32.gmra.mxu0 %v73
    %v113 = vpop.f32.mrf.mxu0
    %v114 = vadd.f32 %v28, %v113
    %115 = vdwg.mxu0
    %v116 = vadd.f32 %v93, 0.0
    %v117 = vxor.u32 %v116, 2147483648
    %v118 = vmul.f32 %v117, 1.442695
    %v119 = vpow.pop %v118
    %v120 = vadd.f32 %v119, 1.0
    %v121 = vrcp.pop %v120
    %v122 = vmul.f32 %v120, %v121
    %v123 = vsub.f32 1.0, %v122
    %v124 = vmul.f32 %v121, %v123
    %v125 = vadd.f32 %v121, %v124
    %vm126 = vweird.f32 %v120
    %vm127 = vweird.f32 %v121
    %vm128 = vmor %vm126, %vm127
    %v129 = vsel %vm128, %v121, %v125
    %v130 = vand.u32 2147483647, %v120
    %vm131 = vcmp.eq.f32.partialorder %v130, 8.507059e+37
    %v132 = vand.u32 %v120, 2147483648
    %v133 = vor.u32 1.1754944e-38, %v132
    %v134 = vsel %vm131, %v133, %v129
    %v135 = vmul.f32 1.0, %v134
    %v136 = vadd.f32 %v29, 0.0
    %v137 = vmul.f32 %v135, %v136
    %139 = vrot.lane.b32.xlu0 %v137, 64
    %v140 = vpop.permute.xlu0 %139
    %v142 = vadd.f32 %v93, %v140
    %v143 = vtanh.pop %v142
    %v144 = vsub.f32 1.0, %v135
    %146 = vrot.lane.b32.xlu0 %v143, 96
    %v147 = vpop.permute.xlu0 %146
    %v149 = vmul.f32 %v144, %v147
    %v150 = vmul.f32 %v135, 0.0
    %v151 = vadd.f32 %v149, %v150
    %153 = vrot.lane.b32.xlu0 %v151, 96
    %v154 = vpop.permute.xlu0 %153
    %vm155 = vcmask 261120
    %v156 = vsel %vm155, %v154, 0
    %158 = vmatpush.msra.mxu0 0.0
    %159 = vmatpush.msra.mxu0 0.0
    %160 = vmatpush.msra.mxu0 0.0
    %161 = vmatpush.msra.mxu0 0.0
    %162 = vmatpush.msra.mxu0 0.0
    %163 = vmatpush.msra.mxu0 0.0
    %164 = vmatpush.msra.mxu0 0.0
    %165 = vmatpush.msra.mxu0 0.0
    %166 = vmatpush.msra.mxu0 0.0
    %167 = vmatpush.msra.mxu0 0.0
    %168 = vmatpush.msra.mxu0 0.0
    %169 = vmatpush.msra.mxu0 0.0
    %170 = vmatpush.msra.mxu0 %v40
    %171 = vmatpush.msra.mxu0 %v38
    %172 = vmatpush.msra.mxu0 %v36
    %173 = vmatpush.msra.mxu0 %v34
    %174 = vmatmul.f32.gmra.mxu0 %v156
    %v175 = vpop.f32.mrf.mxu0
    %v176 = vadd.f32 0.0, %v175
    %177 = vdwg.mxu0
    %178 = vmatpush.msra.mxu0 0.0
    %179 = vmatpush.msra.mxu0 0.0
    %180 = vmatpush.msra.mxu0 0.0
    %181 = vmatpush.msra.mxu0 0.0
    %182 = vmatpush.msra.mxu0 0.0
    %183 = vmatpush.msra.mxu0 0.0
    %184 = vmatpush.msra.mxu0 0.0
    %185 = vmatpush.msra.mxu0 0.0
    %186 = vmatpush.msra.mxu0 0.0
    %187 = vmatpush.msra.mxu0 0.0
    %188 = vmatpush.msra.mxu0 0.0
    %189 = vmatpush.msra.mxu0 0.0
    %190 = vmatpush.msra.mxu0 %v41
    %191 = vmatpush.msra.mxu0 %v39
    %192 = vmatpush.msra.mxu0 %v37
    %193 = vmatpush.msra.mxu0 %v35
    %194 = vmatmul.f32.gmra.mxu0 %v156
    %v195 = vpop.f32.mrf.mxu0
    %v196 = vadd.f32 0.0, %v195
    %197 = vdwg.mxu0
    %v198 = vadd.f32 %v196, %v30
    %v199 = vadd.f32 %v96, %v176
    %v200 = vxor.u32 %v199, 2147483648
    %v201 = vmul.f32 %v200, 1.442695
    %v202 = vpow.pop %v201
    %v203 = vadd.f32 %v202, 1.0
    %v204 = vrcp.pop %v203
    %v205 = vmul.f32 %v203, %v204
    %v206 = vsub.f32 1.0, %v205
    %v207 = vmul.f32 %v204, %v206
    %v208 = vadd.f32 %v204, %v207
    %vm209 = vweird.f32 %v203
    %vm210 = vweird.f32 %v204
    %vm211 = vmor %vm209, %vm210
    %v212 = vsel %vm211, %v204, %v208
    %v213 = vand.u32 2147483647, %v203
    %vm214 = vcmp.eq.f32.partialorder %v213, 8.507059e+37
    %v215 = vand.u32 %v203, 2147483648
    %v216 = vor.u32 1.1754944e-38, %v215
    %v217 = vsel %vm214, %v216, %v212
    %v218 = vmul.f32 1.0, %v217
    %220 = vrot.lane.b32.xlu0 %v29, 64
    %v221 = vpop.permute.xlu0 %220
    %v223 = vadd.f32 %v176, %v221
    %225 = vrot.lane.b32.xlu0 %v223, 64
    %v226 = vpop.permute.xlu0 %225
    %v228 = vmul.f32 %v218, %v226
    %230 = vrot.lane.b32.xlu0 %v228, 64
    %v231 = vpop.permute.xlu0 %230
    %v233 = vadd.f32 %v96, %v231
    %v234 = vtanh.pop %v233
    %v235 = vsub.f32 1.0, %v218
    %237 = vrot.lane.b32.xlu0 %v234, 96
    %v238 = vpop.permute.xlu0 %237
    %v240 = vmul.f32 %v235, %v238
    %v241 = vmul.f32 %v218, %v151
    %v242 = vadd.f32 %v240, %v241
    %v243 = vadd.f32 %v198, 0.0
    %v244 = vxor.u32 %v243, 2147483648
    %v245 = vmul.f32 %v244, 1.442695
    %v246 = vpow.pop %v245
    %v247 = vadd.f32 %v246, 1.0
    %v248 = vrcp.pop %v247
    %v249 = vmul.f32 %v247, %v248
    %v250 = vsub.f32 1.0, %v249
    %v251 = vmul.f32 %v248, %v250
    %v252 = vadd.f32 %v248, %v251
    %vm253 = vweird.f32 %v247
    %vm254 = vweird.f32 %v248
    %vm255 = vmor %vm253, %vm254
    %v256 = vsel %vm255, %v248, %v252
    %v257 = vand.u32 2147483647, %v247
    %vm258 = vcmp.eq.f32.partialorder %v257, 8.507059e+37
    %v259 = vand.u32 %v247, 2147483648
    %v260 = vor.u32 1.1754944e-38, %v259
    %v261 = vsel %vm258, %v260, %v256
    %v262 = vmul.f32 1.0, %v261
    %v263 = vadd.f32 %v31, 0.0
    %v264 = vmul.f32 %v262, %v263
    %266 = vrot.lane.b32.xlu0 %v264, 64
    %v267 = vpop.permute.xlu0 %266
    %v269 = vadd.f32 %v198, %v267
    %v270 = vtanh.pop %v269
    %v271 = vsub.f32 1.0, %v262
    %273 = vrot.lane.b32.xlu0 %v270, 96
    %v274 = vpop.permute.xlu0 %273
    %v276 = vmul.f32 %v271, %v274
    %v277 = vmul.f32 %v262, 0.0
    %v278 = vadd.f32 %v276, %v277
    %280 = vrot.lane.b32.xlu0 %v242, 96
    %v281 = vpop.permute.xlu0 %280
    %v282 = vsel %vm155, %v281, 0
    %284 = vmatpush.msra.mxu0 0.0
    %285 = vmatpush.msra.mxu0 0.0
    %286 = vmatpush.msra.mxu0 0.0
    %287 = vmatpush.msra.mxu0 0.0
    %288 = vmatpush.msra.mxu0 0.0
    %289 = vmatpush.msra.mxu0 0.0
    %290 = vmatpush.msra.mxu0 0.0
    %291 = vmatpush.msra.mxu0 0.0
    %292 = vmatpush.msra.mxu0 0.0
    %293 = vmatpush.msra.mxu0 0.0
    %294 = vmatpush.msra.mxu0 0.0
    %295 = vmatpush.msra.mxu0 0.0
    %296 = vmatpush.msra.mxu0 %v40
    %297 = vmatpush.msra.mxu0 %v38
    %298 = vmatpush.msra.mxu0 %v36
    %299 = vmatpush.msra.mxu0 %v34
    %300 = vmatmul.f32.gmra.mxu0 %v282
    %v301 = vpop.f32.mrf.mxu0
    %v302 = vadd.f32 0.0, %v301
    %303 = vdwg.mxu0
    %304 = vmatpush.msra.mxu0 0.0
    %305 = vmatpush.msra.mxu0 0.0
    %306 = vmatpush.msra.mxu0 0.0
    %307 = vmatpush.msra.mxu0 0.0
    %308 = vmatpush.msra.mxu0 0.0
    %309 = vmatpush.msra.mxu0 0.0
    %310 = vmatpush.msra.mxu0 0.0
    %311 = vmatpush.msra.mxu0 0.0
    %312 = vmatpush.msra.mxu0 0.0
    %313 = vmatpush.msra.mxu0 0.0
    %314 = vmatpush.msra.mxu0 0.0
    %315 = vmatpush.msra.mxu0 0.0
    %316 = vmatpush.msra.mxu0 %v41
    %317 = vmatpush.msra.mxu0 %v39
    %318 = vmatpush.msra.mxu0 %v37
    %319 = vmatpush.msra.mxu0 %v35
    %320 = vmatmul.f32.gmra.mxu0 %v282
    %v321 = vpop.f32.mrf.mxu0
    %v322 = vadd.f32 0.0, %v321
    %323 = vdwg.mxu0
    %v324 = vld [vmem:[#allocation2 + $0x10] sm:$0xff]
    %v325 = vld [vmem:[#allocation2 + $0x68] sm:$0xff]
    %v326 = vld [vmem:[#allocation2 + $0xc0] sm:$0xff]
    %v327 = vld [vmem:[#allocation2 + $0x118] sm:$0xff]
    %329 = vrot.lane.b32.xlu0 %v278, 96
    %v330 = vpop.permute.xlu0 %329
    %v331 = vsel %vm155, %v330, 0
    %333 = vmatpush.msra.mxu0 0.0
    %334 = vmatpush.msra.mxu0 0.0
    %335 = vmatpush.msra.mxu0 0.0
    %336 = vmatpush.msra.mxu0 0.0
    %337 = vmatpush.msra.mxu0 0.0
    %338 = vmatpush.msra.mxu0 0.0
    %339 = vmatpush.msra.mxu0 0.0
    %340 = vmatpush.msra.mxu0 0.0
    %341 = vmatpush.msra.mxu0 0.0
    %342 = vmatpush.msra.mxu0 0.0
    %343 = vmatpush.msra.mxu0 0.0
    %344 = vmatpush.msra.mxu0 0.0
    %345 = vmatpush.msra.mxu0 %v327
    %346 = vmatpush.msra.mxu0 %v326
    %347 = vmatpush.msra.mxu0 %v325
    %348 = vmatpush.msra.mxu0 %v324
    %349 = vmatmul.f32.gmra.mxu0 %v331
    %v350 = vpop.f32.mrf.mxu0
    %v351 = vadd.f32 0.0, %v350
    %352 = vdwg.mxu0
    %v353 = vadd.f32 %v322, %v30
    %355 = vrot.lane.b32.xlu0 %v351, 32
    %v356 = vpop.permute.xlu0 %355
    %v358 = vadd.f32 %v33, %v356
    %v359 = vadd.f32 %v99, %v302
    %v360 = vxor.u32 %v359, 2147483648
    %v361 = vmul.f32 %v360, 1.442695
    %v362 = vpow.pop %v361
    %v363 = vadd.f32 %v362, 1.0
    %v364 = vrcp.pop %v363
    %v365 = vmul.f32 %v363, %v364
    %v366 = vsub.f32 1.0, %v365
    %v367 = vmul.f32 %v364, %v366
    %v368 = vadd.f32 %v364, %v367
    %vm369 = vweird.f32 %v363
    %vm370 = vweird.f32 %v364
    %vm371 = vmor %vm369, %vm370
    %v372 = vsel %vm371, %v364, %v368
    %v373 = vand.u32 2147483647, %v363
    %vm374 = vcmp.eq.f32.partialorder %v373, 8.507059e+37
    %v375 = vand.u32 %v363, 2147483648
    %v376 = vor.u32 1.1754944e-38, %v375
    %v377 = vsel %vm374, %v376, %v372
    %v378 = vmul.f32 1.0, %v377
    %v379 = vadd.f32 %v302, %v221
    %381 = vrot.lane.b32.xlu0 %v379, 64
    %v382 = vpop.permute.xlu0 %381
    %v384 = vmul.f32 %v378, %v382
    %386 = vrot.lane.b32.xlu0 %v384, 64
    %v387 = vpop.permute.xlu0 %386
    %v389 = vadd.f32 %v99, %v387
    %v390 = vtanh.pop %v389
    %v391 = vsub.f32 1.0, %v378
    %393 = vrot.lane.b32.xlu0 %v390, 96
    %v394 = vpop.permute.xlu0 %393
    %v396 = vmul.f32 %v391, %v394
    %v397 = vmul.f32 %v378, %v242
    %v398 = vadd.f32 %v396, %v397
    %v399 = vadd.f32 %v353, %v351
    %v400 = vxor.u32 %v399, 2147483648
    %v401 = vmul.f32 %v400, 1.442695
    %v402 = vpow.pop %v401
    %v403 = vadd.f32 %v402, 1.0
    %v404 = vrcp.pop %v403
    %v405 = vmul.f32 %v403, %v404
    %v406 = vsub.f32 1.0, %v405
    %v407 = vmul.f32 %v404, %v406
    %v408 = vadd.f32 %v404, %v407
    %vm409 = vweird.f32 %v403
    %vm410 = vweird.f32 %v404
    %vm411 = vmor %vm409, %vm410
    %v412 = vsel %vm411, %v404, %v408
    %v413 = vand.u32 2147483647, %v403
    %vm414 = vcmp.eq.f32.partialorder %v413, 8.507059e+37
    %v415 = vand.u32 %v403, 2147483648
    %v416 = vor.u32 1.1754944e-38, %v415
    %v417 = vsel %vm414, %v416, %v412
    %v418 = vmul.f32 1.0, %v417
    %420 = vrot.lane.b32.xlu0 %v31, 64
    %v421 = vpop.permute.xlu0 %420
    %v423 = vadd.f32 %v351, %v421
    %425 = vrot.lane.b32.xlu0 %v423, 64
    %v426 = vpop.permute.xlu0 %425
    %v428 = vmul.f32 %v418, %v426
    %430 = vrot.lane.b32.xlu0 %v428, 64
    %v431 = vpop.permute.xlu0 %430
    %v433 = vadd.f32 %v353, %v431
    %v434 = vtanh.pop %v433
    %v435 = vsub.f32 1.0, %v418
    %437 = vrot.lane.b32.xlu0 %v434, 96
    %v438 = vpop.permute.xlu0 %437
    %v440 = vmul.f32 %v435, %v438
    %v441 = vmul.f32 %v418, %v278
    %v442 = vadd.f32 %v440, %v441
    %444 = vrot.lane.b32.xlu0 %v398, 96
    %v445 = vpop.permute.xlu0 %444
    %v446 = vsel %vm155, %v445, 0
    %448 = vmatpush.msra.mxu0 0.0
    %449 = vmatpush.msra.mxu0 0.0
    %450 = vmatpush.msra.mxu0 0.0
    %451 = vmatpush.msra.mxu0 0.0
    %452 = vmatpush.msra.mxu0 0.0
    %453 = vmatpush.msra.mxu0 0.0
    %454 = vmatpush.msra.mxu0 0.0
    %455 = vmatpush.msra.mxu0 0.0
    %456 = vmatpush.msra.mxu0 0.0
    %457 = vmatpush.msra.mxu0 0.0
    %458 = vmatpush.msra.mxu0 0.0
    %459 = vmatpush.msra.mxu0 0.0
    %460 = vmatpush.msra.mxu0 %v40
    %461 = vmatpush.msra.mxu0 %v38
    %462 = vmatpush.msra.mxu0 %v36
    %463 = vmatpush.msra.mxu0 %v34
    %464 = vmatmul.f32.gmra.mxu0 %v446
    %v465 = vpop.f32.mrf.mxu0
    %v466 = vadd.f32 0.0, %v465
    %467 = vdwg.mxu0
    %468 = vmatpush.msra.mxu0 0.0
    %469 = vmatpush.msra.mxu0 0.0
    %470 = vmatpush.msra.mxu0 0.0
    %471 = vmatpush.msra.mxu0 0.0
    %472 = vmatpush.msra.mxu0 0.0
    %473 = vmatpush.msra.mxu0 0.0
    %474 = vmatpush.msra.mxu0 0.0
    %475 = vmatpush.msra.mxu0 0.0
    %476 = vmatpush.msra.mxu0 0.0
    %477 = vmatpush.msra.mxu0 0.0
    %478 = vmatpush.msra.mxu0 0.0
    %479 = vmatpush.msra.mxu0 0.0
    %480 = vmatpush.msra.mxu0 %v41
    %481 = vmatpush.msra.mxu0 %v39
    %482 = vmatpush.msra.mxu0 %v37
    %483 = vmatpush.msra.mxu0 %v35
    %484 = vmatmul.f32.gmra.mxu0 %v446
    %v485 = vpop.f32.mrf.mxu0
    %v486 = vadd.f32 0.0, %v485
    %487 = vdwg.mxu0
    %v488 = vld [vmem:[#allocation2 + $0x18] sm:$0xff]
    %v489 = vld [vmem:[#allocation2 + $0x70] sm:$0xff]
    %v490 = vld [vmem:[#allocation2 + $0xc8] sm:$0xff]
    %v491 = vld [vmem:[#allocation2 + $0x120] sm:$0xff]
    %493 = vrot.lane.b32.xlu0 %v442, 96
    %v494 = vpop.permute.xlu0 %493
    %v495 = vsel %vm155, %v494, 0
    %497 = vmatpush.msra.mxu0 0.0
    %498 = vmatpush.msra.mxu0 0.0
    %499 = vmatpush.msra.mxu0 0.0
    %500 = vmatpush.msra.mxu0 0.0
    %501 = vmatpush.msra.mxu0 0.0
    %502 = vmatpush.msra.mxu0 0.0
    %503 = vmatpush.msra.mxu0 0.0
    %504 = vmatpush.msra.mxu0 0.0
    %505 = vmatpush.msra.mxu0 0.0
    %506 = vmatpush.msra.mxu0 0.0
    %507 = vmatpush.msra.mxu0 0.0
    %508 = vmatpush.msra.mxu0 0.0
    %509 = vmatpush.msra.mxu0 %v491
    %510 = vmatpush.msra.mxu0 %v490
    %511 = vmatpush.msra.mxu0 %v489
    %512 = vmatpush.msra.mxu0 %v488
    %513 = vmatmul.f32.gmra.mxu0 %v495
    %v514 = vpop.f32.mrf.mxu0
    %v515 = vadd.f32 0.0, %v514
    %516 = vdwg.mxu0
    %v517 = vadd.f32 %v486, %v30
    %519 = vrot.lane.b32.xlu0 %v515, 32
    %v520 = vpop.permute.xlu0 %519
    %v522 = vadd.f32 %v358, %v520
    %v523 = vadd.f32 %v102, %v466
    %v524 = vxor.u32 %v523, 2147483648
    %v525 = vmul.f32 %v524, 1.442695
    %v526 = vpow.pop %v525
    %v527 = vadd.f32 %v526, 1.0
    %v528 = vrcp.pop %v527
    %v529 = vmul.f32 %v527, %v528
    %v530 = vsub.f32 1.0, %v529
    %v531 = vmul.f32 %v528, %v530
    %v532 = vadd.f32 %v528, %v531
    %vm533 = vweird.f32 %v527
    %vm534 = vweird.f32 %v528
    %vm535 = vmor %vm533, %vm534
    %v536 = vsel %vm535, %v528, %v532
    %v537 = vand.u32 2147483647, %v527
    %vm538 = vcmp.eq.f32.partialorder %v537, 8.507059e+37
    %v539 = vand.u32 %v527, 2147483648
    %v540 = vor.u32 1.1754944e-38, %v539
    %v541 = vsel %vm538, %v540, %v536
    %v542 = vmul.f32 1.0, %v541
    %v543 = vadd.f32 %v466, %v221
    %545 = vrot.lane.b32.xlu0 %v543, 64
    %v546 = vpop.permute.xlu0 %545
    %v548 = vmul.f32 %v542, %v546
    %550 = vrot.lane.b32.xlu0 %v548, 64
    %v551 = vpop.permute.xlu0 %550
    %v553 = vadd.f32 %v102, %v551
    %v554 = vtanh.pop %v553
    %v555 = vsub.f32 1.0, %v542
    %557 = vrot.lane.b32.xlu0 %v554, 96
    %v558 = vpop.permute.xlu0 %557
    %v560 = vmul.f32 %v555, %v558
    %v561 = vmul.f32 %v542, %v398
    %v562 = vadd.f32 %v560, %v561
    %v563 = vadd.f32 %v517, %v515
    %v564 = vxor.u32 %v563, 2147483648
    %v565 = vmul.f32 %v564, 1.442695
    %v566 = vpow.pop %v565
    %v567 = vadd.f32 %v566, 1.0
    %v568 = vrcp.pop %v567
    %v569 = vmul.f32 %v567, %v568
    %v570 = vsub.f32 1.0, %v569
    %v571 = vmul.f32 %v568, %v570
    %v572 = vadd.f32 %v568, %v571
    %vm573 = vweird.f32 %v567
    %vm574 = vweird.f32 %v568
    %vm575 = vmor %vm573, %vm574
    %v576 = vsel %vm575, %v568, %v572
    %v577 = vand.u32 2147483647, %v567
    %vm578 = vcmp.eq.f32.partialorder %v577, 8.507059e+37
    %v579 = vand.u32 %v567, 2147483648
    %v580 = vor.u32 1.1754944e-38, %v579
    %v581 = vsel %vm578, %v580, %v576
    %v582 = vmul.f32 1.0, %v581
    %v583 = vadd.f32 %v515, %v421
    %585 = vrot.lane.b32.xlu0 %v583, 64
    %v586 = vpop.permute.xlu0 %585
    %v588 = vmul.f32 %v582, %v586
    %590 = vrot.lane.b32.xlu0 %v588, 64
    %v591 = vpop.permute.xlu0 %590
    %v593 = vadd.f32 %v517, %v591
    %v594 = vtanh.pop %v593
    %v595 = vsub.f32 1.0, %v582
    %597 = vrot.lane.b32.xlu0 %v594, 96
    %v598 = vpop.permute.xlu0 %597
    %v600 = vmul.f32 %v595, %v598
    %v601 = vmul.f32 %v582, %v442
    %v602 = vadd.f32 %v600, %v601
    %604 = vrot.lane.b32.xlu0 %v562, 96
    %v605 = vpop.permute.xlu0 %604
    %v606 = vsel %vm155, %v605, 0
    %608 = vmatpush.msra.mxu0 0.0
    %609 = vmatpush.msra.mxu0 0.0
    %610 = vmatpush.msra.mxu0 0.0
    %611 = vmatpush.msra.mxu0 0.0
    %612 = vmatpush.msra.mxu0 0.0
    %613 = vmatpush.msra.mxu0 0.0
    %614 = vmatpush.msra.mxu0 0.0
    %615 = vmatpush.msra.mxu0 0.0
    %616 = vmatpush.msra.mxu0 0.0
    %617 = vmatpush.msra.mxu0 0.0
    %618 = vmatpush.msra.mxu0 0.0
    %619 = vmatpush.msra.mxu0 0.0
    %620 = vmatpush.msra.mxu0 %v40
    %621 = vmatpush.msra.mxu0 %v38
    %622 = vmatpush.msra.mxu0 %v36
    %623 = vmatpush.msra.mxu0 %v34
    %624 = vmatmul.f32.gmra.mxu0 %v606
    %v625 = vpop.f32.mrf.mxu0
    %v626 = vadd.f32 0.0, %v625
    %627 = vdwg.mxu0
    %628 = vmatpush.msra.mxu0 0.0
    %629 = vmatpush.msra.mxu0 0.0
    %630 = vmatpush.msra.mxu0 0.0
    %631 = vmatpush.msra.mxu0 0.0
    %632 = vmatpush.msra.mxu0 0.0
    %633 = vmatpush.msra.mxu0 0.0
    %634 = vmatpush.msra.mxu0 0.0
    %635 = vmatpush.msra.mxu0 0.0
    %636 = vmatpush.msra.mxu0 0.0
    %637 = vmatpush.msra.mxu0 0.0
    %638 = vmatpush.msra.mxu0 0.0
    %639 = vmatpush.msra.mxu0 0.0
    %640 = vmatpush.msra.mxu0 %v41
    %641 = vmatpush.msra.mxu0 %v39
    %642 = vmatpush.msra.mxu0 %v37
    %643 = vmatpush.msra.mxu0 %v35
    %644 = vmatmul.f32.gmra.mxu0 %v606
    %v645 = vpop.f32.mrf.mxu0
    %v646 = vadd.f32 0.0, %v645
    %647 = vdwg.mxu0
    %v648 = vld [vmem:[#allocation2 + $0x20] sm:$0xff]
    %v649 = vld [vmem:[#allocation2 + $0x78] sm:$0xff]
    %v650 = vld [vmem:[#allocation2 + $0xd0] sm:$0xff]
    %v651 = vld [vmem:[#allocation2 + $0x128] sm:$0xff]
    %653 = vrot.lane.b32.xlu0 %v602, 96
    %v654 = vpop.permute.xlu0 %653
    %v655 = vsel %vm155, %v654, 0
    %657 = vmatpush.msra.mxu0 0.0
    %658 = vmatpush.msra.mxu0 0.0
    %659 = vmatpush.msra.mxu0 0.0
    %660 = vmatpush.msra.mxu0 0.0
    %661 = vmatpush.msra.mxu0 0.0
    %662 = vmatpush.msra.mxu0 0.0
    %663 = vmatpush.msra.mxu0 0.0
    %664 = vmatpush.msra.mxu0 0.0
    %665 = vmatpush.msra.mxu0 0.0
    %666 = vmatpush.msra.mxu0 0.0
    %667 = vmatpush.msra.mxu0 0.0
    %668 = vmatpush.msra.mxu0 0.0
    %669 = vmatpush.msra.mxu0 %v651
    %670 = vmatpush.msra.mxu0 %v650
    %671 = vmatpush.msra.mxu0 %v649
    %672 = vmatpush.msra.mxu0 %v648
    %673 = vmatmul.f32.gmra.mxu0 %v655
    %v674 = vpop.f32.mrf.mxu0
    %v675 = vadd.f32 0.0, %v674
    %676 = vdwg.mxu0
    %v677 = vadd.f32 %v646, %v30
    %679 = vrot.lane.b32.xlu0 %v675, 32
    %v680 = vpop.permute.xlu0 %679
    %v682 = vadd.f32 %v522, %v680
    %v683 = vadd.f32 %v105, %v626
    %v684 = vxor.u32 %v683, 2147483648
    %v685 = vmul.f32 %v684, 1.442695
    %v686 = vpow.pop %v685
    %v687 = vadd.f32 %v686, 1.0
    %v688 = vrcp.pop %v687
    %v689 = vmul.f32 %v687, %v688
    %v690 = vsub.f32 1.0, %v689
    %v691 = vmul.f32 %v688, %v690
    %v692 = vadd.f32 %v688, %v691
    %vm693 = vweird.f32 %v687
    %vm694 = vweird.f32 %v688
    %vm695 = vmor %vm693, %vm694
    %v696 = vsel %vm695, %v688, %v692
    %v697 = vand.u32 2147483647, %v687
    %vm698 = vcmp.eq.f32.partialorder %v697, 8.507059e+37
    %v699 = vand.u32 %v687, 2147483648
    %v700 = vor.u32 1.1754944e-38, %v699
    %v701 = vsel %vm698, %v700, %v696
    %v702 = vmul.f32 1.0, %v701
    %v703 = vadd.f32 %v626, %v221
    %705 = vrot.lane.b32.xlu0 %v703, 64
    %v706 = vpop.permute.xlu0 %705
    %v708 = vmul.f32 %v702, %v706
    %710 = vrot.lane.b32.xlu0 %v708, 64
    %v711 = vpop.permute.xlu0 %710
    %v713 = vadd.f32 %v105, %v711
    %v714 = vtanh.pop %v713
    %v715 = vsub.f32 1.0, %v702
    %717 = vrot.lane.b32.xlu0 %v714, 96
    %v718 = vpop.permute.xlu0 %717
    %v720 = vmul.f32 %v715, %v718
    %v721 = vmul.f32 %v702, %v562
    %v722 = vadd.f32 %v720, %v721
    %v723 = vadd.f32 %v677, %v675
    %v724 = vxor.u32 %v723, 2147483648
    %v725 = vmul.f32 %v724, 1.442695
    %v726 = vpow.pop %v725
    %v727 = vadd.f32 %v726, 1.0
    %v728 = vrcp.pop %v727
    %v729 = vmul.f32 %v727, %v728
    %v730 = vsub.f32 1.0, %v729
    %v731 = vmul.f32 %v728, %v730
    %v732 = vadd.f32 %v728, %v731
    %vm733 = vweird.f32 %v727
    %vm734 = vweird.f32 %v728
    %vm735 = vmor %vm733, %vm734
    %v736 = vsel %vm735, %v728, %v732
    %v737 = vand.u32 2147483647, %v727
    %vm738 = vcmp.eq.f32.partialorder %v737, 8.507059e+37
    %v739 = vand.u32 %v727, 2147483648
    %v740 = vor.u32 1.1754944e-38, %v739
    %v741 = vsel %vm738, %v740, %v736
    %v742 = vmul.f32 1.0, %v741
    %v743 = vadd.f32 %v675, %v421
    %745 = vrot.lane.b32.xlu0 %v743, 64
    %v746 = vpop.permute.xlu0 %745
    %v748 = vmul.f32 %v742, %v746
    %750 = vrot.lane.b32.xlu0 %v748, 64
    %v751 = vpop.permute.xlu0 %750
    %v753 = vadd.f32 %v677, %v751
    %v754 = vtanh.pop %v753
    %v755 = vsub.f32 1.0, %v742
    %757 = vrot.lane.b32.xlu0 %v754, 96
    %v758 = vpop.permute.xlu0 %757
    %v760 = vmul.f32 %v755, %v758
    %v761 = vmul.f32 %v742, %v602
    %v762 = vadd.f32 %v760, %v761
    %764 = vrot.lane.b32.xlu0 %v722, 96
    %v765 = vpop.permute.xlu0 %764
    %v766 = vsel %vm155, %v765, 0
    %768 = vmatpush.msra.mxu0 0.0
    %769 = vmatpush.msra.mxu0 0.0
    %770 = vmatpush.msra.mxu0 0.0
    %771 = vmatpush.msra.mxu0 0.0
    %772 = vmatpush.msra.mxu0 0.0
    %773 = vmatpush.msra.mxu0 0.0
    %774 = vmatpush.msra.mxu0 0.0
    %775 = vmatpush.msra.mxu0 0.0
    %776 = vmatpush.msra.mxu0 0.0
    %777 = vmatpush.msra.mxu0 0.0
    %778 = vmatpush.msra.mxu0 0.0
    %779 = vmatpush.msra.mxu0 0.0
    %780 = vmatpush.msra.mxu0 %v40
    %781 = vmatpush.msra.mxu0 %v38
    %782 = vmatpush.msra.mxu0 %v36
    %783 = vmatpush.msra.mxu0 %v34
    %784 = vmatmul.f32.gmra.mxu0 %v766
    %v785 = vpop.f32.mrf.mxu0
    %v786 = vadd.f32 0.0, %v785
    %787 = vdwg.mxu0
    %788 = vmatpush.msra.mxu0 0.0
    %789 = vmatpush.msra.mxu0 0.0
    %790 = vmatpush.msra.mxu0 0.0
    %791 = vmatpush.msra.mxu0 0.0
    %792 = vmatpush.msra.mxu0 0.0
    %793 = vmatpush.msra.mxu0 0.0
    %794 = vmatpush.msra.mxu0 0.0
    %795 = vmatpush.msra.mxu0 0.0
    %796 = vmatpush.msra.mxu0 0.0
    %797 = vmatpush.msra.mxu0 0.0
    %798 = vmatpush.msra.mxu0 0.0
    %799 = vmatpush.msra.mxu0 0.0
    %800 = vmatpush.msra.mxu0 %v41
    %801 = vmatpush.msra.mxu0 %v39
    %802 = vmatpush.msra.mxu0 %v37
    %803 = vmatpush.msra.mxu0 %v35
    %804 = vmatmul.f32.gmra.mxu0 %v766
    %v805 = vpop.f32.mrf.mxu0
    %v806 = vadd.f32 0.0, %v805
    %807 = vdwg.mxu0
    %v808 = vld [vmem:[#allocation2 + $0x28] sm:$0xff]
    %v809 = vld [vmem:[#allocation2 + $0x80] sm:$0xff]
    %v810 = vld [vmem:[#allocation2 + $0xd8] sm:$0xff]
    %v811 = vld [vmem:[#allocation2 + $0x130] sm:$0xff]
    %813 = vrot.lane.b32.xlu0 %v762, 96
    %v814 = vpop.permute.xlu0 %813
    %v815 = vsel %vm155, %v814, 0
    %817 = vmatpush.msra.mxu0 0.0
    %818 = vmatpush.msra.mxu0 0.0
    %819 = vmatpush.msra.mxu0 0.0
    %820 = vmatpush.msra.mxu0 0.0
    %821 = vmatpush.msra.mxu0 0.0
    %822 = vmatpush.msra.mxu0 0.0
    %823 = vmatpush.msra.mxu0 0.0
    %824 = vmatpush.msra.mxu0 0.0
    %825 = vmatpush.msra.mxu0 0.0
    %826 = vmatpush.msra.mxu0 0.0
    %827 = vmatpush.msra.mxu0 0.0
    %828 = vmatpush.msra.mxu0 0.0
    %829 = vmatpush.msra.mxu0 %v811
    %830 = vmatpush.msra.mxu0 %v810
    %831 = vmatpush.msra.mxu0 %v809
    %832 = vmatpush.msra.mxu0 %v808
    %833 = vmatmul.f32.gmra.mxu0 %v815
    %v834 = vpop.f32.mrf.mxu0
    %v835 = vadd.f32 0.0, %v834
    %836 = vdwg.mxu0
    %v837 = vadd.f32 %v806, %v30
    %839 = vrot.lane.b32.xlu0 %v835, 32
    %v840 = vpop.permute.xlu0 %839
    %v842 = vadd.f32 %v682, %v840
    %v843 = vadd.f32 %v108, %v786
    %v844 = vxor.u32 %v843, 2147483648
    %v845 = vmul.f32 %v844, 1.442695
    %v846 = vpow.pop %v845
    %v847 = vadd.f32 %v846, 1.0
    %v848 = vrcp.pop %v847
    %v849 = vmul.f32 %v847, %v848
    %v850 = vsub.f32 1.0, %v849
    %v851 = vmul.f32 %v848, %v850
    %v852 = vadd.f32 %v848, %v851
    %vm853 = vweird.f32 %v847
    %vm854 = vweird.f32 %v848
    %vm855 = vmor %vm853, %vm854
    %v856 = vsel %vm855, %v848, %v852
    %v857 = vand.u32 2147483647, %v847
    %vm858 = vcmp.eq.f32.partialorder %v857, 8.507059e+37
    %v859 = vand.u32 %v847, 2147483648
    %v860 = vor.u32 1.1754944e-38, %v859
    %v861 = vsel %vm858, %v860, %v856
    %v862 = vmul.f32 1.0, %v861
    %v863 = vadd.f32 %v786, %v221
    %865 = vrot.lane.b32.xlu0 %v863, 64
    %v866 = vpop.permute.xlu0 %865
    %v868 = vmul.f32 %v862, %v866
    %870 = vrot.lane.b32.xlu0 %v868, 64
    %v871 = vpop.permute.xlu0 %870
    %v873 = vadd.f32 %v108, %v871
    %v874 = vtanh.pop %v873
    %v875 = vsub.f32 1.0, %v862
    %877 = vrot.lane.b32.xlu0 %v874, 96
    %v878 = vpop.permute.xlu0 %877
    %v880 = vmul.f32 %v875, %v878
    %v881 = vmul.f32 %v862, %v722
    %v882 = vadd.f32 %v880, %v881
    %v883 = vadd.f32 %v837, %v835
    %v884 = vxor.u32 %v883, 2147483648
    %v885 = vmul.f32 %v884, 1.442695
    %v886 = vpow.pop %v885
    %v887 = vadd.f32 %v886, 1.0
    %v888 = vrcp.pop %v887
    %v889 = vmul.f32 %v887, %v888
    %v890 = vsub.f32 1.0, %v889
    %v891 = vmul.f32 %v888, %v890
    %v892 = vadd.f32 %v888, %v891
    %vm893 = vweird.f32 %v887
    %vm894 = vweird.f32 %v888
    %vm895 = vmor %vm893, %vm894
    %v896 = vsel %vm895, %v888, %v892
    %v897 = vand.u32 2147483647, %v887
    %vm898 = vcmp.eq.f32.partialorder %v897, 8.507059e+37
    %v899 = vand.u32 %v887, 2147483648
    %v900 = vor.u32 1.1754944e-38, %v899
    %v901 = vsel %vm898, %v900, %v896
    %v902 = vmul.f32 1.0, %v901
    %v903 = vadd.f32 %v835, %v421
    %905 = vrot.lane.b32.xlu0 %v903, 64
    %v906 = vpop.permute.xlu0 %905
    %v908 = vmul.f32 %v902, %v906
    %910 = vrot.lane.b32.xlu0 %v908, 64
    %v911 = vpop.permute.xlu0 %910
    %v913 = vadd.f32 %v837, %v911
    %v914 = vtanh.pop %v913
    %v915 = vsub.f32 1.0, %v902
    %917 = vrot.lane.b32.xlu0 %v914, 96
    %v918 = vpop.permute.xlu0 %917
    %v920 = vmul.f32 %v915, %v918
    %v921 = vmul.f32 %v902, %v762
    %v922 = vadd.f32 %v920, %v921
    %924 = vrot.lane.b32.xlu0 %v882, 96
    %v925 = vpop.permute.xlu0 %924
    %v926 = vsel %vm155, %v925, 0
    %928 = vmatpush.msra.mxu0 0.0
    %929 = vmatpush.msra.mxu0 0.0
    %930 = vmatpush.msra.mxu0 0.0
    %931 = vmatpush.msra.mxu0 0.0
    %932 = vmatpush.msra.mxu0 0.0
    %933 = vmatpush.msra.mxu0 0.0
    %934 = vmatpush.msra.mxu0 0.0
    %935 = vmatpush.msra.mxu0 0.0
    %936 = vmatpush.msra.mxu0 0.0
    %937 = vmatpush.msra.mxu0 0.0
    %938 = vmatpush.msra.mxu0 0.0
    %939 = vmatpush.msra.mxu0 0.0
    %940 = vmatpush.msra.mxu0 %v40
    %941 = vmatpush.msra.mxu0 %v38
    %942 = vmatpush.msra.mxu0 %v36
    %943 = vmatpush.msra.mxu0 %v34
    %944 = vmatmul.f32.gmra.mxu0 %v926
    %v945 = vpop.f32.mrf.mxu0
    %v946 = vadd.f32 0.0, %v945
    %947 = vdwg.mxu0
    %948 = vmatpush.msra.mxu0 0.0
    %949 = vmatpush.msra.mxu0 0.0
    %950 = vmatpush.msra.mxu0 0.0
    %951 = vmatpush.msra.mxu0 0.0
    %952 = vmatpush.msra.mxu0 0.0
    %953 = vmatpush.msra.mxu0 0.0
    %954 = vmatpush.msra.mxu0 0.0
    %955 = vmatpush.msra.mxu0 0.0
    %956 = vmatpush.msra.mxu0 0.0
    %957 = vmatpush.msra.mxu0 0.0
    %958 = vmatpush.msra.mxu0 0.0
    %959 = vmatpush.msra.mxu0 0.0
    %960 = vmatpush.msra.mxu0 %v41
    %961 = vmatpush.msra.mxu0 %v39
    %962 = vmatpush.msra.mxu0 %v37
    %963 = vmatpush.msra.mxu0 %v35
    %964 = vmatmul.f32.gmra.mxu0 %v926
    %v965 = vpop.f32.mrf.mxu0
    %v966 = vadd.f32 0.0, %v965
    %967 = vdwg.mxu0
    %v968 = vld [vmem:[#allocation2 + $0x30] sm:$0xff]
    %v969 = vld [vmem:[#allocation2 + $0x88] sm:$0xff]
    %v970 = vld [vmem:[#allocation2 + $0xe0] sm:$0xff]
    %v971 = vld [vmem:[#allocation2 + $0x138] sm:$0xff]
    %973 = vrot.lane.b32.xlu0 %v922, 96
    %v974 = vpop.permute.xlu0 %973
    %v975 = vsel %vm155, %v974, 0
    %977 = vmatpush.msra.mxu0 0.0
    %978 = vmatpush.msra.mxu0 0.0
    %979 = vmatpush.msra.mxu0 0.0
    %980 = vmatpush.msra.mxu0 0.0
    %981 = vmatpush.msra.mxu0 0.0
    %982 = vmatpush.msra.mxu0 0.0
    %983 = vmatpush.msra.mxu0 0.0
    %984 = vmatpush.msra.mxu0 0.0
    %985 = vmatpush.msra.mxu0 0.0
    %986 = vmatpush.msra.mxu0 0.0
    %987 = vmatpush.msra.mxu0 0.0
    %988 = vmatpush.msra.mxu0 0.0
    %989 = vmatpush.msra.mxu0 %v971
    %990 = vmatpush.msra.mxu0 %v970
    %991 = vmatpush.msra.mxu0 %v969
    %992 = vmatpush.msra.mxu0 %v968
    %993 = vmatmul.f32.gmra.mxu0 %v975
    %v994 = vpop.f32.mrf.mxu0
    %v995 = vadd.f32 0.0, %v994
    %996 = vdwg.mxu0
    %v997 = vadd.f32 %v966, %v30
    %999 = vrot.lane.b32.xlu0 %v995, 32
    %v1000 = vpop.permute.xlu0 %999
    %v1002 = vadd.f32 %v842, %v1000
    %v1003 = vadd.f32 %v111, %v946
    %v1004 = vxor.u32 %v1003, 2147483648
    %v1005 = vmul.f32 %v1004, 1.442695
    %v1006 = vpow.pop %v1005
    %v1007 = vadd.f32 %v1006, 1.0
    %v1008 = vrcp.pop %v1007
    %v1009 = vmul.f32 %v1007, %v1008
    %v1010 = vsub.f32 1.0, %v1009
    %v1011 = vmul.f32 %v1008, %v1010
    %v1012 = vadd.f32 %v1008, %v1011
    %vm1013 = vweird.f32 %v1007
    %vm1014 = vweird.f32 %v1008
    %vm1015 = vmor %vm1013, %vm1014
    %v1016 = vsel %vm1015, %v1008, %v1012
    %v1017 = vand.u32 2147483647, %v1007
    %vm1018 = vcmp.eq.f32.partialorder %v1017, 8.507059e+37
    %v1019 = vand.u32 %v1007, 2147483648
    %v1020 = vor.u32 1.1754944e-38, %v1019
    %v1021 = vsel %vm1018, %v1020, %v1016
    %v1022 = vmul.f32 1.0, %v1021
    %v1023 = vadd.f32 %v946, %v221
    %1025 = vrot.lane.b32.xlu0 %v1023, 64
    %v1026 = vpop.permute.xlu0 %1025
    %v1028 = vmul.f32 %v1022, %v1026
    %1030 = vrot.lane.b32.xlu0 %v1028, 64
    %v1031 = vpop.permute.xlu0 %1030
    %v1033 = vadd.f32 %v111, %v1031
    %v1034 = vtanh.pop %v1033
    %v1035 = vsub.f32 1.0, %v1022
    %1037 = vrot.lane.b32.xlu0 %v1034, 96
    %v1038 = vpop.permute.xlu0 %1037
    %v1040 = vmul.f32 %v1035, %v1038
    %v1041 = vmul.f32 %v1022, %v882
    %v1042 = vadd.f32 %v1040, %v1041
    %v1043 = vadd.f32 %v997, %v995
    %v1044 = vxor.u32 %v1043, 2147483648
    %v1045 = vmul.f32 %v1044, 1.442695
    %v1046 = vpow.pop %v1045
    %v1047 = vadd.f32 %v1046, 1.0
    %v1048 = vrcp.pop %v1047
    %v1049 = vmul.f32 %v1047, %v1048
    %v1050 = vsub.f32 1.0, %v1049
    %v1051 = vmul.f32 %v1048, %v1050
    %v1052 = vadd.f32 %v1048, %v1051
    %vm1053 = vweird.f32 %v1047
    %vm1054 = vweird.f32 %v1048
    %vm1055 = vmor %vm1053, %vm1054
    %v1056 = vsel %vm1055, %v1048, %v1052
    %v1057 = vand.u32 2147483647, %v1047
    %vm1058 = vcmp.eq.f32.partialorder %v1057, 8.507059e+37
    %v1059 = vand.u32 %v1047, 2147483648
    %v1060 = vor.u32 1.1754944e-38, %v1059
    %v1061 = vsel %vm1058, %v1060, %v1056
    %v1062 = vmul.f32 1.0, %v1061
    %v1063 = vadd.f32 %v995, %v421
    %1065 = vrot.lane.b32.xlu0 %v1063, 64
    %v1066 = vpop.permute.xlu0 %1065
    %v1068 = vmul.f32 %v1062, %v1066
    %1070 = vrot.lane.b32.xlu0 %v1068, 64
    %v1071 = vpop.permute.xlu0 %1070
    %v1073 = vadd.f32 %v997, %v1071
    %v1074 = vtanh.pop %v1073
    %v1075 = vsub.f32 1.0, %v1062
    %1077 = vrot.lane.b32.xlu0 %v1074, 96
    %v1078 = vpop.permute.xlu0 %1077
    %v1080 = vmul.f32 %v1075, %v1078
    %v1081 = vmul.f32 %v1062, %v922
    %v1082 = vadd.f32 %v1080, %v1081
    %1084 = vrot.lane.b32.xlu0 %v1042, 96
    %v1085 = vpop.permute.xlu0 %1084
    %v1086 = vsel %vm155, %v1085, 0
    %1088 = vmatpush.msra.mxu0 0.0
    %1089 = vmatpush.msra.mxu0 0.0
    %1090 = vmatpush.msra.mxu0 0.0
    %1091 = vmatpush.msra.mxu0 0.0
    %1092 = vmatpush.msra.mxu0 0.0
    %1093 = vmatpush.msra.mxu0 0.0
    %1094 = vmatpush.msra.mxu0 0.0
    %1095 = vmatpush.msra.mxu0 0.0
    %1096 = vmatpush.msra.mxu0 0.0
    %1097 = vmatpush.msra.mxu0 0.0
    %1098 = vmatpush.msra.mxu0 0.0
    %1099 = vmatpush.msra.mxu0 0.0
    %1100 = vmatpush.msra.mxu0 %v40
    %1101 = vmatpush.msra.mxu0 %v38
    %1102 = vmatpush.msra.mxu0 %v36
    %1103 = vmatpush.msra.mxu0 %v34
    %1104 = vmatmul.f32.gmra.mxu0 %v1086
    %v1105 = vpop.f32.mrf.mxu0
    %v1106 = vadd.f32 0.0, %v1105
    %1107 = vdwg.mxu0
    %1108 = vmatpush.msra.mxu0 0.0
    %1109 = vmatpush.msra.mxu0 0.0
    %1110 = vmatpush.msra.mxu0 0.0
    %1111 = vmatpush.msra.mxu0 0.0
    %1112 = vmatpush.msra.mxu0 0.0
    %1113 = vmatpush.msra.mxu0 0.0
    %1114 = vmatpush.msra.mxu0 0.0
    %1115 = vmatpush.msra.mxu0 0.0
    %1116 = vmatpush.msra.mxu0 0.0
    %1117 = vmatpush.msra.mxu0 0.0
    %1118 = vmatpush.msra.mxu0 0.0
    %1119 = vmatpush.msra.mxu0 0.0
    %1120 = vmatpush.msra.mxu0 %v41
    %1121 = vmatpush.msra.mxu0 %v39
    %1122 = vmatpush.msra.mxu0 %v37
    %1123 = vmatpush.msra.mxu0 %v35
    %1124 = vmatmul.f32.gmra.mxu0 %v1086
    %v1125 = vpop.f32.mrf.mxu0
    %v1126 = vadd.f32 0.0, %v1125
    %1127 = vdwg.mxu0
    %v1128 = vld [vmem:[#allocation2 + $0x38] sm:$0xff]
    %v1129 = vld [vmem:[#allocation2 + $0x90] sm:$0xff]
    %v1130 = vld [vmem:[#allocation2 + $0xe8] sm:$0xff]
    %v1131 = vld [vmem:[#allocation2 + $0x140] sm:$0xff]
    %1133 = vrot.lane.b32.xlu0 %v1082, 96
    %v1134 = vpop.permute.xlu0 %1133
    %v1135 = vsel %vm155, %v1134, 0
    %1137 = vmatpush.msra.mxu0 0.0
    %1138 = vmatpush.msra.mxu0 0.0
    %1139 = vmatpush.msra.mxu0 0.0
    %1140 = vmatpush.msra.mxu0 0.0
    %1141 = vmatpush.msra.mxu0 0.0
    %1142 = vmatpush.msra.mxu0 0.0
    %1143 = vmatpush.msra.mxu0 0.0
    %1144 = vmatpush.msra.mxu0 0.0
    %1145 = vmatpush.msra.mxu0 0.0
    %1146 = vmatpush.msra.mxu0 0.0
    %1147 = vmatpush.msra.mxu0 0.0
    %1148 = vmatpush.msra.mxu0 0.0
    %1149 = vmatpush.msra.mxu0 %v1131
    %1150 = vmatpush.msra.mxu0 %v1130
    %1151 = vmatpush.msra.mxu0 %v1129
    %1152 = vmatpush.msra.mxu0 %v1128
    %1153 = vmatmul.f32.gmra.mxu0 %v1135
    %v1154 = vpop.f32.mrf.mxu0
    %v1155 = vadd.f32 0.0, %v1154
    %1156 = vdwg.mxu0
    %v1157 = vadd.f32 %v1126, %v30
    %1159 = vrot.lane.b32.xlu0 %v1155, 32
    %v1160 = vpop.permute.xlu0 %1159
    %v1162 = vadd.f32 %v1002, %v1160
    %v1163 = vadd.f32 %v114, %v1106
    %v1164 = vxor.u32 %v1163, 2147483648
    %v1165 = vmul.f32 %v1164, 1.442695
    %v1166 = vpow.pop %v1165
    %v1167 = vadd.f32 %v1166, 1.0
    %v1168 = vrcp.pop %v1167
    %v1169 = vmul.f32 %v1167, %v1168
    %v1170 = vsub.f32 1.0, %v1169
    %v1171 = vmul.f32 %v1168, %v1170
    %v1172 = vadd.f32 %v1168, %v1171
    %vm1173 = vweird.f32 %v1167
    %vm1174 = vweird.f32 %v1168
    %vm1175 = vmor %vm1173, %vm1174
    %v1176 = vsel %vm1175, %v1168, %v1172
    %v1177 = vand.u32 2147483647, %v1167
    %vm1178 = vcmp.eq.f32.partialorder %v1177, 8.507059e+37
    %v1179 = vand.u32 %v1167, 2147483648
    %v1180 = vor.u32 1.1754944e-38, %v1179
    %v1181 = vsel %vm1178, %v1180, %v1176
    %v1182 = vmul.f32 1.0, %v1181
    %v1183 = vadd.f32 %v1106, %v221
    %1185 = vrot.lane.b32.xlu0 %v1183, 64
    %v1186 = vpop.permute.xlu0 %1185
    %v1188 = vmul.f32 %v1182, %v1186
    %1190 = vrot.lane.b32.xlu0 %v1188, 64
    %v1191 = vpop.permute.xlu0 %1190
    %v1193 = vadd.f32 %v114, %v1191
    %v1194 = vtanh.pop %v1193
    %v1195 = vsub.f32 1.0, %v1182
    %1197 = vrot.lane.b32.xlu0 %v1194, 96
    %v1198 = vpop.permute.xlu0 %1197
    %v1200 = vmul.f32 %v1195, %v1198
    %v1201 = vmul.f32 %v1182, %v1042
    %v1202 = vadd.f32 %v1200, %v1201
    %v1203 = vadd.f32 %v1157, %v1155
    %v1204 = vxor.u32 %v1203, 2147483648
    %v1205 = vmul.f32 %v1204, 1.442695
    %v1206 = vpow.pop %v1205
    %v1207 = vadd.f32 %v1206, 1.0
    %v1208 = vrcp.pop %v1207
    %v1209 = vmul.f32 %v1207, %v1208
    %v1210 = vsub.f32 1.0, %v1209
    %v1211 = vmul.f32 %v1208, %v1210
    %v1212 = vadd.f32 %v1208, %v1211
    %vm1213 = vweird.f32 %v1207
    %vm1214 = vweird.f32 %v1208
    %vm1215 = vmor %vm1213, %vm1214
    %v1216 = vsel %vm1215, %v1208, %v1212
    %v1217 = vand.u32 2147483647, %v1207
    %vm1218 = vcmp.eq.f32.partialorder %v1217, 8.507059e+37
    %v1219 = vand.u32 %v1207, 2147483648
    %v1220 = vor.u32 1.1754944e-38, %v1219
    %v1221 = vsel %vm1218, %v1220, %v1216
    %v1222 = vmul.f32 1.0, %v1221
    %v1223 = vadd.f32 %v1155, %v421
    %1225 = vrot.lane.b32.xlu0 %v1223, 64
    %v1226 = vpop.permute.xlu0 %1225
    %v1228 = vmul.f32 %v1222, %v1226
    %1230 = vrot.lane.b32.xlu0 %v1228, 64
    %v1231 = vpop.permute.xlu0 %1230
    %v1233 = vadd.f32 %v1157, %v1231
    %v1234 = vtanh.pop %v1233
    %v1235 = vsub.f32 1.0, %v1222
    %1237 = vrot.lane.b32.xlu0 %v1234, 96
    %v1238 = vpop.permute.xlu0 %1237
    %v1240 = vmul.f32 %v1235, %v1238
    %v1241 = vmul.f32 %v1222, %v1082
    %v1242 = vadd.f32 %v1240, %v1241
    %1244 = vrot.lane.b32.xlu0 %v1202, 96
    %v1245 = vpop.permute.xlu0 %1244
    %v1246 = vsel %vm155, %v1245, 0
    %1248 = vmatpush.msra.mxu0 0.0
    %1249 = vmatpush.msra.mxu0 0.0
    %1250 = vmatpush.msra.mxu0 0.0
    %1251 = vmatpush.msra.mxu0 0.0
    %1252 = vmatpush.msra.mxu0 0.0
    %1253 = vmatpush.msra.mxu0 0.0
    %1254 = vmatpush.msra.mxu0 0.0
    %1255 = vmatpush.msra.mxu0 0.0
    %1256 = vmatpush.msra.mxu0 0.0
    %1257 = vmatpush.msra.mxu0 0.0
    %1258 = vmatpush.msra.mxu0 0.0
    %1259 = vmatpush.msra.mxu0 0.0
    %1260 = vmatpush.msra.mxu0 %v41
    %1261 = vmatpush.msra.mxu0 %v39
    %1262 = vmatpush.msra.mxu0 %v37
    %1263 = vmatpush.msra.mxu0 %v35
    %1264 = vmatmul.f32.gmra.mxu0 %v1246
    %v1265 = vpop.f32.mrf.mxu0
    %v1266 = vadd.f32 0.0, %v1265
    %1267 = vdwg.mxu0
    %v1268 = vld [vmem:[#allocation2 + $0x40] sm:$0xff]
    %v1269 = vld [vmem:[#allocation2 + $0x98] sm:$0xff]
    %v1270 = vld [vmem:[#allocation2 + $0xf0] sm:$0xff]
    %v1271 = vld [vmem:[#allocation2 + $0x148] sm:$0xff]
    %1273 = vrot.lane.b32.xlu0 %v1242, 96
    %v1274 = vpop.permute.xlu0 %1273
    %v1275 = vsel %vm155, %v1274, 0
    %1277 = vmatpush.msra.mxu0 0.0
    %1278 = vmatpush.msra.mxu0 0.0
    %1279 = vmatpush.msra.mxu0 0.0
    %1280 = vmatpush.msra.mxu0 0.0
    %1281 = vmatpush.msra.mxu0 0.0
    %1282 = vmatpush.msra.mxu0 0.0
    %1283 = vmatpush.msra.mxu0 0.0
    %1284 = vmatpush.msra.mxu0 0.0
    %1285 = vmatpush.msra.mxu0 0.0
    %1286 = vmatpush.msra.mxu0 0.0
    %1287 = vmatpush.msra.mxu0 0.0
    %1288 = vmatpush.msra.mxu0 0.0
    %1289 = vmatpush.msra.mxu0 %v1271
    %1290 = vmatpush.msra.mxu0 %v1270
    %1291 = vmatpush.msra.mxu0 %v1269
    %1292 = vmatpush.msra.mxu0 %v1268
    %1293 = vmatmul.f32.gmra.mxu0 %v1275
    %v1294 = vpop.f32.mrf.mxu0
    %v1295 = vadd.f32 0.0, %v1294
    %1296 = vdwg.mxu0
    %v1297 = vadd.f32 %v1266, %v30
    %1299 = vrot.lane.b32.xlu0 %v1295, 32
    %v1300 = vpop.permute.xlu0 %1299
    %v1302 = vadd.f32 %v1162, %v1300
    %v1303 = vadd.f32 %v1297, %v1295
    %v1304 = vxor.u32 %v1303, 2147483648
    %v1305 = vmul.f32 %v1304, 1.442695
    %v1306 = vpow.pop %v1305
    %v1307 = vadd.f32 %v1306, 1.0
    %v1308 = vrcp.pop %v1307
    %v1309 = vmul.f32 %v1307, %v1308
    %v1310 = vsub.f32 1.0, %v1309
    %v1311 = vmul.f32 %v1308, %v1310
    %v1312 = vadd.f32 %v1308, %v1311
    %vm1313 = vweird.f32 %v1307
    %vm1314 = vweird.f32 %v1308
    %vm1315 = vmor %vm1313, %vm1314
    %v1316 = vsel %vm1315, %v1308, %v1312
    %v1317 = vand.u32 2147483647, %v1307
    %vm1318 = vcmp.eq.f32.partialorder %v1317, 8.507059e+37
    %v1319 = vand.u32 %v1307, 2147483648
    %v1320 = vor.u32 1.1754944e-38, %v1319
    %v1321 = vsel %vm1318, %v1320, %v1316
    %v1322 = vmul.f32 1.0, %v1321
    %v1323 = vadd.f32 %v1295, %v421
    %1325 = vrot.lane.b32.xlu0 %v1323, 64
    %v1326 = vpop.permute.xlu0 %1325
    %v1328 = vmul.f32 %v1322, %v1326
    %1330 = vrot.lane.b32.xlu0 %v1328, 64
    %v1331 = vpop.permute.xlu0 %1330
    %v1333 = vadd.f32 %v1297, %v1331
    %v1334 = vtanh.pop %v1333
    %v1335 = vsub.f32 1.0, %v1322
    %1337 = vrot.lane.b32.xlu0 %v1334, 96
    %v1338 = vpop.permute.xlu0 %1337
    %v1340 = vmul.f32 %v1335, %v1338
    %v1341 = vmul.f32 %v1322, %v1242
    %v1342 = vadd.f32 %v1340, %v1341
    %v1343 = vld [vmem:[#allocation2 + $0x48] sm:$0xff]
    %v1344 = vld [vmem:[#allocation2 + $0xa0] sm:$0xff]
    %v1345 = vld [vmem:[#allocation2 + $0xf8] sm:$0xff]
    %v1346 = vld [vmem:[#allocation2 + $0x150] sm:$0xff]
    %1348 = vrot.lane.b32.xlu0 %v1342, 96
    %v1349 = vpop.permute.xlu0 %1348
    %1354 = vrot.lane.b32.xlu0 %v1343, 32
    %v1355 = vpop.permute.xlu0 %1354
    %1356 = vrot.lane.b32.xlu0 %v1344, 32
    %v1357 = vpop.permute.xlu0 %1356
    %1358 = vrot.lane.b32.xlu0 %v1345, 32
    %v1359 = vpop.permute.xlu0 %1358
    %1360 = vrot.lane.b32.xlu0 %v1346, 32
    %v1361 = vpop.permute.xlu0 %1360
    %v1366 = vsel %vm155, %v1349, 0
    %1368 = vmatpush.msra.mxu0 0.0
    %1369 = vmatpush.msra.mxu0 0.0
    %1370 = vmatpush.msra.mxu0 0.0
    %1371 = vmatpush.msra.mxu0 0.0
    %1372 = vmatpush.msra.mxu0 0.0
    %1373 = vmatpush.msra.mxu0 0.0
    %1374 = vmatpush.msra.mxu0 0.0
    %1375 = vmatpush.msra.mxu0 0.0
    %1376 = vmatpush.msra.mxu0 0.0
    %1377 = vmatpush.msra.mxu0 0.0
    %1378 = vmatpush.msra.mxu0 0.0
    %1379 = vmatpush.msra.mxu0 0.0
    %1380 = vmatpush.msra.mxu0 %v1361
    %1381 = vmatpush.msra.mxu0 %v1359
    %1382 = vmatpush.msra.mxu0 %v1357
    %1383 = vmatpush.msra.mxu0 %v1355
    %1384 = vmatmul.f32.gmra.mxu0 %v1366
    %v1385 = vpop.f32.mrf.mxu0
    %v1386 = vadd.f32 0.0, %v1385
    %1387 = vdwg.mxu0
    %v1388 = vadd.f32 %v1302, %v1386
    %vm1389 = vcmask 130048
    %1390 = vst.msk [vmem:[#allocation5] sm:$0xff] %vm1389, %v1388
    // Predicated region
    $region14: #{tpu_custom_call.1} parent=1 // pred_check
      _
    $region15: #{tpu_custom_call.1} parent=1 // pred_check_branch
      %1392 = sbr.rel (0) target = $region17
    $region16: #{tpu_custom_call.1} parent=1 // pred_region
      %1394 = vsyncadd [#allocation4], 0
      %s1396 = sshll.u32 [#allocation5], 4
      %s1397 = int_to_ptr.vmem [resolvable:$true] %s1396
      %s1398 = sshll.u32 %s2, 4
      %s1399 = int_to_ptr.hbm [resolvable:$true] %s1398
      %1401 = dma.vmem_to_hbm [thread:$0]  %s1397, 128, %s1399, [#allocation4]
    $region17: #{tpu_custom_call.1} parent=1 // pred_fallthru
      _
    // Predicated region
    $region18: #{tpu_custom_call.1} parent=1 // pred_check
      _
    $region19: #{tpu_custom_call.1} parent=1 // pred_check_branch
      %1403 = sbr.rel (0) target = $region21
    $region20: #{tpu_custom_call.1} parent=1 // pred_region
      %1405 = dma.done [#allocation4], 128
    $region21: #{tpu_custom_call.1} parent=1 // pred_fallthru
      _
    %1406 = vsyncpa [#allocation3], 1
    %1407 = vsyncpa [#allocation4], 1

</llo_original>
